<compile_context>
chip_gen: v7x
topology: tpu7x:2x2x1
jax: 0.10.0
libtpu: 0.0.40
codegen_flags: <defaults>
</compile_context>

<pallas_src>
import functools

import jax
import jax.numpy as jnp
import numpy as np
from jax.experimental import pallas as pl
from jax.experimental.pallas import tpu as pltpu


def _round_up(n, m):
    return ((n + m - 1) // m) * m


def rnnatt_kernel(
    x_ref, noise_ref,                    # (T*Bp, Ip) f32 each, time-major, zero-padded
    we_ref, be_ref,                      # (Ip, Ep) bf16, (1, Ep) f32
    wih_ref, whh_ref, bih_ref, bhh_ref,  # (Ep, 3Hp) bf16, (Hp, 3Hp) bf16, (1, 3Hp) f32 x2
    wa_ref, ba_ref,                      # (Hp, Wp) bf16, (1, Wp) f32   (pad bias = -1e30)
    wc_ref, bc_ref,                      # (Hp, Cp) bf16, (1, Cp) f32   (pad bias = -1e30)
    out_ref,                             # (Bp, Cp) f32
    *, seq_len, batch_padded,
):
    T, Bp = seq_len, batch_padded
    Hp = whh_ref.shape[0]
    f32, bf16 = jnp.float32, jnp.bfloat16

    # ---- x + 0.01 * U[0,1)  (noise supplied by wrapper; dropout = identity, eval mode) ----
    x = x_ref[...] + 0.01 * noise_ref[...]                                   # (T*Bp, Ip) f32

    # ---- embedding: Linear + ReLU (bf16 MXU operands, f32 accumulation) ----
    emb = jnp.maximum(
        jnp.dot(x.astype(bf16), we_ref[...], preferred_element_type=f32) + be_ref[...],
        0.0)                                                                 # (T*Bp, Ep) f32

    # ---- hoisted GRU input projection: ONE big matmul for all timesteps ----
    gi = jnp.dot(emb.astype(bf16), wih_ref[...], preferred_element_type=f32) + bih_ref[...]

    # ---- GRU recurrence (PyTorch gate order r, z, n), fully unrolled, values stay in vregs ----
    whh = whh_ref[...]                                   # stationary recurrent weight (hoisted)
    bhh = bhh_ref[...]
    h = jnp.zeros((Bp, Hp), f32)
    hs = []
    for t in range(T):                                   # T static -> unrolled at trace time
        gi_t = gi[t * Bp:(t + 1) * Bp, :]                # sublane-aligned static row slice
        gh = jnp.dot(h.astype(bf16), whh, preferred_element_type=f32) + bhh
        r = jax.nn.sigmoid(gi_t[:, 0 * Hp:1 * Hp] + gh[:, 0 * Hp:1 * Hp])
        z = jax.nn.sigmoid(gi_t[:, 1 * Hp:2 * Hp] + gh[:, 1 * Hp:2 * Hp])
        n = jnp.tanh(gi_t[:, 2 * Hp:3 * Hp] + r * gh[:, 2 * Hp:3 * Hp])
        h = (1.0 - z) * n + z * h
        hs.append(h)                                     # rnn_output[:, t, :]
    rnn = jnp.stack(hs, axis=0)                          # (T, Bp, Hp)

    # ---- attention: Linear(H -> window) + softmax (pad cols carry -1e30 bias -> prob 0) ----
    att = jnp.dot(h.astype(bf16), wa_ref[...], preferred_element_type=f32) + ba_ref[...]
    att = att - jnp.max(att, axis=1, keepdims=True)
    p = jnp.exp(att)
    attn_w = p / jnp.sum(p, axis=1, keepdims=True)       # exact division (weights sum to 1)

    # ---- attn_applied = bmm(attn_w.unsqueeze(1), rnn_output).squeeze(1), vectorized ----
    aw_t = jnp.transpose(attn_w[:, :T])                  # (T, Bp)  single small transpose
    applied = jnp.sum(aw_t[:, :, None] * rnn, axis=0)    # (Bp, Hp) one multiply + one reduce

    # ---- classify: Linear(H -> classes) + LogSoftmax (pad cols -> -1e30 -> prob 0) ----
    logits = jnp.dot(applied.astype(bf16), wc_ref[...], preferred_element_type=f32) + bc_ref[...]
    logits = logits - jnp.max(logits, axis=1, keepdims=True)
    out_ref[...] = logits - jnp.log(jnp.sum(jnp.exp(logits), axis=1, keepdims=True))


def pad_params(params, *, input_size, embedding_size, hidden_size, window_size, classes):
    """Pre-transpose and lane-pad every parameter (done once). Weights -> bf16, biases -> f32."""
    I, E, H, W, C = input_size, embedding_size, hidden_size, window_size, classes
    Ip, Ep, Hp = _round_up(I, 128), _round_up(E, 128), _round_up(H, 128)
    Wp, Cp = _round_up(W, 128), _round_up(C, 128)
    f32, bf16 = jnp.float32, jnp.bfloat16
    NEG = -1e30

    def place(rows, cols, block, fill=0.0, dtype=f32):
        out = jnp.full((rows, cols), fill, f32)
        out = out.at[:block.shape[0], :block.shape[1]].set(block)
        return out.astype(dtype)

    we_t = place(Ip, Ep, params["we"].T, dtype=bf16)              # (Ip, Ep)
    be = place(1, Ep, params["be"].reshape(1, -1))                # (1, Ep)

    wih_t = jnp.zeros((Ep, 3 * Hp), f32)
    whh_t = jnp.zeros((Hp, 3 * Hp), f32)
    bih = jnp.zeros((1, 3 * Hp), f32)
    bhh = jnp.zeros((1, 3 * Hp), f32)
    for g in range(3):                                            # gate-blocked padding [r,z,n]
        wih_t = wih_t.at[:E, g * Hp:g * Hp + H].set(params["wih"][g * H:(g + 1) * H, :].T)
        whh_t = whh_t.at[:H, g * Hp:g * Hp + H].set(params["whh"][g * H:(g + 1) * H, :].T)
        bih = bih.at[0, g * Hp:g * Hp + H].set(params["bih"][g * H:(g + 1) * H])
        bhh = bhh.at[0, g * Hp:g * Hp + H].set(params["bhh"][g * H:(g + 1) * H])

    wa_t = place(Hp, Wp, params["wa"].T, dtype=bf16)
    ba = place(1, Wp, params["ba"].reshape(1, -1), fill=NEG)      # pad window cols -> -inf-ish
    wc_t = place(Hp, Cp, params["wc"].T, dtype=bf16)
    bc = place(1, Cp, params["bc"].reshape(1, -1), fill=NEG)      # pad class cols -> -inf-ish

    return dict(we_t=we_t, be=be, wih_t=wih_t.astype(bf16), whh_t=whh_t.astype(bf16),
                bih=bih, bhh=bhh, wa_t=wa_t, ba=ba, wc_t=wc_t, bc=bc)


@functools.partial(jax.jit, static_argnames=("window_size", "classes"))
def rnnatt_forward(x, noise, padded, *, window_size, classes):
    B, T, I = x.shape
    assert T == window_size, "attention bmm requires seq_len == window_size"
    Ip, Ep = padded["we_t"].shape
    Hp = padded["whh_t"].shape[0]
    Wp = padded["wa_t"].shape[1]
    Cp = padded["wc_t"].shape[1]
    Bp = _round_up(max(B, 1), 8)          # sublane-pad the batch -> full (8,128) tiles

    def pad_time_major(a):                # (B,T,I) -> (T*Bp, Ip), zero padded
        a_tm = jnp.transpose(a, (1, 0, 2)).astype(jnp.float32)
        out = jnp.zeros((T, Bp, Ip), jnp.float32).at[:, :B, :I].set(a_tm)
        return out.reshape(T * Bp, Ip)

    x_pad = pad_time_major(x)
    noise_pad = pad_time_major(noise)

    kernel = functools.partial(rnnatt_kernel, seq_len=T, batch_padded=Bp)
    vmem = pl.BlockSpec(memory_space=pltpu.MemorySpace.VMEM)

    flops = 2 * (T * Bp * (Ip * Ep + Ep * 3 * Hp + Hp * 3 * Hp) + Bp * Hp * (Wp + Cp))
    transcendentals = T * Bp * 3 * Hp + Bp * (Wp + Cp)
    bytes_accessed = (2 * x_pad.size * 4 + Bp * Cp * 4
                      + sum(int(np.prod(v.shape)) * v.dtype.itemsize for v in padded.values()))

    out = pl.pallas_call(
        kernel,
        out_shape=jax.ShapeDtypeStruct((Bp, Cp), jnp.float32),
        in_specs=[vmem] * 12,
        out_specs=vmem,
        cost_estimate=pl.CostEstimate(flops=flops, transcendentals=transcendentals,
                                      bytes_accessed=bytes_accessed),
    )(x_pad, noise_pad,
      padded["we_t"], padded["be"],
      padded["wih_t"], padded["whh_t"], padded["bih"], padded["bhh"],
      padded["wa_t"], padded["ba"], padded["wc_t"], padded["bc"])
    return out[:B, :classes]


def rnnatt_reference(x, params, noise):
    """Pure-JAX (f32) reference mirroring the PyTorch forward (eval-mode dropout)."""
    H = params["whh"].shape[1]
    xe = x + 0.01 * noise
    emb = jnp.maximum(xe @ params["we"].T + params["be"], 0.0)
    B, T, _ = emb.shape

    def step(h, x_t):
        gi = x_t @ params["wih"].T + params["bih"]
        gh = h @ params["whh"].T + params["bhh"]
        r = jax.nn.sigmoid(gi[:, :H] + gh[:, :H])
        z = jax.nn.sigmoid(gi[:, H:2 * H] + gh[:, H:2 * H])
        n = jnp.tanh(gi[:, 2 * H:] + r * gh[:, 2 * H:])
        h_new = (1.0 - z) * n + z * h
        return h_new, h_new

    h0 = jnp.zeros((B, H), jnp.float32)
    h_last, hs = jax.lax.scan(step, h0, jnp.transpose(emb, (1, 0, 2)))
    rnn_out = jnp.transpose(hs, (1, 0, 2))                        # (B, T, H)
    att = jax.nn.softmax(h_last @ params["wa"].T + params["ba"], axis=1)
    applied = jnp.einsum("bt,bth->bh", att, rnn_out)
    logits = applied @ params["wc"].T + params["bc"]
    return jax.nn.log_softmax(logits, axis=1)


def init_params(key, input_size, embedding_size, hidden_size, window_size, classes):
    def uniform(k, shape, fan_in):
        bound = 1.0 / np.sqrt(fan_in)
        return jax.random.uniform(k, shape, jnp.float32, -bound, bound)

    ks = jax.random.split(key, 10)
    return {
        "we": uniform(ks[0], (embedding_size, input_size), input_size),
        "be": uniform(ks[1], (embedding_size,), input_size),
        "wih": uniform(ks[2], (3 * hidden_size, embedding_size), hidden_size),
        "whh": uniform(ks[3], (3 * hidden_size, hidden_size), hidden_size),
        "bih": uniform(ks[4], (3 * hidden_size,), hidden_size),
        "bhh": uniform(ks[5], (3 * hidden_size,), hidden_size),
        "wa": uniform(ks[6], (window_size, hidden_size), hidden_size),
        "ba": uniform(ks[7], (window_size,), hidden_size),
        "wc": uniform(ks[8], (classes, hidden_size), hidden_size),
        "bc": uniform(ks[9], (classes,), hidden_size),
    }


if __name__ == "__main__":
    # Small shapes consistent with the module; seq length must equal window_size
    # for the bmm in the attention step to be valid.
    B, T = 2, 8
    input_size, embedding_size, hidden_size, window_size, classes = 12, 16, 32, 8, 5

    key = jax.random.PRNGKey(0)
    k_x, k_p, k_n = jax.random.split(key, 3)
    x = jax.random.normal(k_x, (B, T, input_size), jnp.float32)
    params = init_params(k_p, input_size, embedding_size, hidden_size, window_size, classes)
    padded = pad_params(params, input_size=input_size, embedding_size=embedding_size,
                        hidden_size=hidden_size, window_size=window_size, classes=classes)

    # Tolerances cover the bf16 MXU operands (elementwise math and accumulation stay f32).
    # 1) Deterministic correctness check: zero noise vs. pure-JAX f32 reference.
    zero_noise = jnp.zeros_like(x)
    out0 = jax.block_until_ready(
        rnnatt_forward(x, zero_noise, padded, window_size=window_size, classes=classes))
    ref0 = rnnatt_reference(x, params, zero_noise)
    np.testing.assert_allclose(np.asarray(out0), np.asarray(ref0), rtol=2e-2, atol=2e-2)

    # 2) Full module semantics: x + 0.01 * U[0,1); same noise fed to kernel and reference.
    noise = jax.random.uniform(k_n, x.shape, jnp.float32)         # U[0,1) like torch.rand_like
    out1 = jax.block_until_ready(
        rnnatt_forward(x, noise, padded, window_size=window_size, classes=classes))
    ref1 = rnnatt_reference(x, params, noise)
    np.testing.assert_allclose(np.asarray(out1), np.asarray(ref1), rtol=2e-2, atol=2e-2)

    assert out1.shape == (B, classes)
    assert bool(jnp.all(jnp.isfinite(out1)))
    # log-probabilities must normalize
    assert bool(jnp.all(jnp.abs(jnp.sum(jnp.exp(out1), axis=1) - 1.0) < 1e-3))

    print("KERNEL_OK")
</pallas_src>

<mosaic_0001>
module attributes {stable_mosaic.version = 11 : i64} {
  func.func @rnnatt_kernel(%arg0: memref<64x128xf32, #tpu.memory_space<vmem>>, %arg1: memref<64x128xf32, #tpu.memory_space<vmem>>, %arg2: memref<128x128xbf16, #tpu.memory_space<vmem>>, %arg3: memref<1x128xf32, #tpu.memory_space<vmem>>, %arg4: memref<128x384xbf16, #tpu.memory_space<vmem>>, %arg5: memref<128x384xbf16, #tpu.memory_space<vmem>>, %arg6: memref<1x384xf32, #tpu.memory_space<vmem>>, %arg7: memref<1x384xf32, #tpu.memory_space<vmem>>, %arg8: memref<128x128xbf16, #tpu.memory_space<vmem>>, %arg9: memref<1x128xf32, #tpu.memory_space<vmem>>, %arg10: memref<128x128xbf16, #tpu.memory_space<vmem>>, %arg11: memref<1x128xf32, #tpu.memory_space<vmem>>, %arg12: memref<8x128xf32, #tpu.memory_space<vmem>>) attributes {dimension_semantics = [], scalar_prefetch = 0 : i64, scratch_operands = 0 : i64, tpu.core_type = #tpu.core_type<tc>} {
    %c0 = arith.constant 0 : index
    %c0_0 = arith.constant 0 : index
    %0 = vector.load %arg0[%c0, %c0_0] : memref<64x128xf32, #tpu.memory_space<vmem>>, vector<64x128xf32>
    %c0_1 = arith.constant 0 : index
    %c0_2 = arith.constant 0 : index
    %1 = vector.load %arg1[%c0_1, %c0_2] : memref<64x128xf32, #tpu.memory_space<vmem>>, vector<64x128xf32>
    %cst = arith.constant 0.00999999977 : f32
    %2 = vector.broadcast %cst : f32 to vector<64x128xf32>
    %3 = arith.mulf %2, %1 : vector<64x128xf32>
    %4 = arith.addf %0, %3 : vector<64x128xf32>
    %5 = arith.truncf %4 : vector<64x128xf32> to vector<64x128xbf16>
    %c0_3 = arith.constant 0 : index
    %c0_4 = arith.constant 0 : index
    %6 = vector.load %arg2[%c0_3, %c0_4] : memref<128x128xbf16, #tpu.memory_space<vmem>>, vector<128x128xbf16>
    %cst_5 = arith.constant dense<0.000000e+00> : vector<64x128xf32>
    %7 = tpu.matmul %5, %6, %cst_5 {dimension_numbers = #tpu.dot_dimension_numbers<[1], [0], [0], [1], [0, 0, 1, 1], [], []>} : vector<64x128xbf16>, vector<128x128xbf16>, vector<64x128xf32> -> vector<64x128xf32>
    %c0_6 = arith.constant 0 : index
    %c0_7 = arith.constant 0 : index
    %8 = vector.load %arg3[%c0_6, %c0_7] : memref<1x128xf32, #tpu.memory_space<vmem>>, vector<1x128xf32>
    %9 = vector.broadcast %8 : vector<1x128xf32> to vector<64x128xf32>
    %10 = arith.addf %7, %9 : vector<64x128xf32>
    %cst_8 = arith.constant 0.000000e+00 : f32
    %11 = vector.broadcast %cst_8 : f32 to vector<64x128xf32>
    %12 = arith.maximumf %10, %11 : vector<64x128xf32>
    %13 = arith.truncf %12 : vector<64x128xf32> to vector<64x128xbf16>
    %c0_9 = arith.constant 0 : index
    %c0_10 = arith.constant 0 : index
    %14 = vector.load %arg4[%c0_9, %c0_10] : memref<128x384xbf16, #tpu.memory_space<vmem>>, vector<128x384xbf16>
    %cst_11 = arith.constant dense<0.000000e+00> : vector<64x384xf32>
    %15 = tpu.matmul %13, %14, %cst_11 {dimension_numbers = #tpu.dot_dimension_numbers<[1], [0], [0], [1], [0, 0, 1, 1], [], []>} : vector<64x128xbf16>, vector<128x384xbf16>, vector<64x384xf32> -> vector<64x384xf32>
    %c0_12 = arith.constant 0 : index
    %c0_13 = arith.constant 0 : index
    %16 = vector.load %arg6[%c0_12, %c0_13] : memref<1x384xf32, #tpu.memory_space<vmem>>, vector<1x384xf32>
    %17 = vector.broadcast %16 : vector<1x384xf32> to vector<64x384xf32>
    %18 = arith.addf %15, %17 : vector<64x384xf32>
    %c0_14 = arith.constant 0 : index
    %c0_15 = arith.constant 0 : index
    %19 = vector.load %arg5[%c0_14, %c0_15] : memref<128x384xbf16, #tpu.memory_space<vmem>>, vector<128x384xbf16>
    %c0_16 = arith.constant 0 : index
    %c0_17 = arith.constant 0 : index
    %20 = vector.load %arg7[%c0_16, %c0_17] : memref<1x384xf32, #tpu.memory_space<vmem>>, vector<1x384xf32>
    %cst_18 = arith.constant 0.000000e+00 : f32
    %21 = vector.broadcast %cst_18 : f32 to vector<8x128xf32>
    %22 = vector.extract_strided_slice %18 {offsets = [0, 0], sizes = [8, 384], strides = [1, 1]} : vector<64x384xf32> to vector<8x384xf32>
    %23 = arith.truncf %21 : vector<8x128xf32> to vector<8x128xbf16>
    %cst_19 = arith.constant dense<0.000000e+00> : vector<8x384xf32>
    %24 = tpu.matmul %23, %19, %cst_19 {dimension_numbers = #tpu.dot_dimension_numbers<[1], [0], [0], [1], [0, 0, 1, 1], [], []>} : vector<8x128xbf16>, vector<128x384xbf16>, vector<8x384xf32> -> vector<8x384xf32>
    %25 = vector.broadcast %20 : vector<1x384xf32> to vector<8x384xf32>
    %26 = arith.addf %24, %25 : vector<8x384xf32>
    %27 = vector.extract_strided_slice %22 {offsets = [0, 0], sizes = [8, 128], strides = [1, 1]} : vector<8x384xf32> to vector<8x128xf32>
    %28 = vector.extract_strided_slice %26 {offsets = [0, 0], sizes = [8, 128], strides = [1, 1]} : vector<8x384xf32> to vector<8x128xf32>
    %29 = arith.addf %27, %28 : vector<8x128xf32>
    %30 = arith.negf %29 : vector<8x128xf32>
    %31 = math.exp %30 : vector<8x128xf32>
    %cst_20 = arith.constant 1.000000e+00 : f32
    %32 = vector.broadcast %cst_20 : f32 to vector<8x128xf32>
    %33 = arith.addf %32, %31 : vector<8x128xf32>
    %34 = arith.divf %32, %33 : vector<8x128xf32>
    %35 = vector.extract_strided_slice %22 {offsets = [0, 128], sizes = [8, 128], strides = [1, 1]} : vector<8x384xf32> to vector<8x128xf32>
    %36 = vector.extract_strided_slice %26 {offsets = [0, 128], sizes = [8, 128], strides = [1, 1]} : vector<8x384xf32> to vector<8x128xf32>
    %37 = arith.addf %35, %36 : vector<8x128xf32>
    %38 = arith.negf %37 : vector<8x128xf32>
    %39 = math.exp %38 : vector<8x128xf32>
    %cst_21 = arith.constant 1.000000e+00 : f32
    %40 = vector.broadcast %cst_21 : f32 to vector<8x128xf32>
    %41 = arith.addf %40, %39 : vector<8x128xf32>
    %42 = arith.divf %40, %41 : vector<8x128xf32>
    %43 = vector.extract_strided_slice %22 {offsets = [0, 256], sizes = [8, 128], strides = [1, 1]} : vector<8x384xf32> to vector<8x128xf32>
    %44 = vector.extract_strided_slice %26 {offsets = [0, 256], sizes = [8, 128], strides = [1, 1]} : vector<8x384xf32> to vector<8x128xf32>
    %45 = arith.mulf %34, %44 : vector<8x128xf32>
    %46 = arith.addf %43, %45 : vector<8x128xf32>
    %47 = math.tanh %46 : vector<8x128xf32>
    %cst_22 = arith.constant 1.000000e+00 : f32
    %48 = vector.broadcast %cst_22 : f32 to vector<8x128xf32>
    %49 = arith.subf %48, %42 : vector<8x128xf32>
    %50 = arith.mulf %49, %47 : vector<8x128xf32>
    %51 = arith.mulf %42, %21 : vector<8x128xf32>
    %52 = arith.addf %50, %51 : vector<8x128xf32>
    %53 = vector.extract_strided_slice %18 {offsets = [8, 0], sizes = [8, 384], strides = [1, 1]} : vector<64x384xf32> to vector<8x384xf32>
    %54 = arith.truncf %52 : vector<8x128xf32> to vector<8x128xbf16>
    %cst_23 = arith.constant dense<0.000000e+00> : vector<8x384xf32>
    %55 = tpu.matmul %54, %19, %cst_23 {dimension_numbers = #tpu.dot_dimension_numbers<[1], [0], [0], [1], [0, 0, 1, 1], [], []>} : vector<8x128xbf16>, vector<128x384xbf16>, vector<8x384xf32> -> vector<8x384xf32>
    %56 = vector.broadcast %20 : vector<1x384xf32> to vector<8x384xf32>
    %57 = arith.addf %55, %56 : vector<8x384xf32>
    %58 = vector.extract_strided_slice %53 {offsets = [0, 0], sizes = [8, 128], strides = [1, 1]} : vector<8x384xf32> to vector<8x128xf32>
    %59 = vector.extract_strided_slice %57 {offsets = [0, 0], sizes = [8, 128], strides = [1, 1]} : vector<8x384xf32> to vector<8x128xf32>
    %60 = arith.addf %58, %59 : vector<8x128xf32>
    %61 = arith.negf %60 : vector<8x128xf32>
    %62 = math.exp %61 : vector<8x128xf32>
    %cst_24 = arith.constant 1.000000e+00 : f32
    %63 = vector.broadcast %cst_24 : f32 to vector<8x128xf32>
    %64 = arith.addf %63, %62 : vector<8x128xf32>
    %65 = arith.divf %63, %64 : vector<8x128xf32>
    %66 = vector.extract_strided_slice %53 {offsets = [0, 128], sizes = [8, 128], strides = [1, 1]} : vector<8x384xf32> to vector<8x128xf32>
    %67 = vector.extract_strided_slice %57 {offsets = [0, 128], sizes = [8, 128], strides = [1, 1]} : vector<8x384xf32> to vector<8x128xf32>
    %68 = arith.addf %66, %67 : vector<8x128xf32>
    %69 = arith.negf %68 : vector<8x128xf32>
    %70 = math.exp %69 : vector<8x128xf32>
    %cst_25 = arith.constant 1.000000e+00 : f32
    %71 = vector.broadcast %cst_25 : f32 to vector<8x128xf32>
    %72 = arith.addf %71, %70 : vector<8x128xf32>
    %73 = arith.divf %71, %72 : vector<8x128xf32>
    %74 = vector.extract_strided_slice %53 {offsets = [0, 256], sizes = [8, 128], strides = [1, 1]} : vector<8x384xf32> to vector<8x128xf32>
    %75 = vector.extract_strided_slice %57 {offsets = [0, 256], sizes = [8, 128], strides = [1, 1]} : vector<8x384xf32> to vector<8x128xf32>
    %76 = arith.mulf %65, %75 : vector<8x128xf32>
    %77 = arith.addf %74, %76 : vector<8x128xf32>
    %78 = math.tanh %77 : vector<8x128xf32>
    %cst_26 = arith.constant 1.000000e+00 : f32
    %79 = vector.broadcast %cst_26 : f32 to vector<8x128xf32>
    %80 = arith.subf %79, %73 : vector<8x128xf32>
    %81 = arith.mulf %80, %78 : vector<8x128xf32>
    %82 = arith.mulf %73, %52 : vector<8x128xf32>
    %83 = arith.addf %81, %82 : vector<8x128xf32>
    %84 = vector.extract_strided_slice %18 {offsets = [16, 0], sizes = [8, 384], strides = [1, 1]} : vector<64x384xf32> to vector<8x384xf32>
    %85 = arith.truncf %83 : vector<8x128xf32> to vector<8x128xbf16>
    %cst_27 = arith.constant dense<0.000000e+00> : vector<8x384xf32>
    %86 = tpu.matmul %85, %19, %cst_27 {dimension_numbers = #tpu.dot_dimension_numbers<[1], [0], [0], [1], [0, 0, 1, 1], [], []>} : vector<8x128xbf16>, vector<128x384xbf16>, vector<8x384xf32> -> vector<8x384xf32>
    %87 = vector.broadcast %20 : vector<1x384xf32> to vector<8x384xf32>
    %88 = arith.addf %86, %87 : vector<8x384xf32>
    %89 = vector.extract_strided_slice %84 {offsets = [0, 0], sizes = [8, 128], strides = [1, 1]} : vector<8x384xf32> to vector<8x128xf32>
    %90 = vector.extract_strided_slice %88 {offsets = [0, 0], sizes = [8, 128], strides = [1, 1]} : vector<8x384xf32> to vector<8x128xf32>
    %91 = arith.addf %89, %90 : vector<8x128xf32>
    %92 = arith.negf %91 : vector<8x128xf32>
    %93 = math.exp %92 : vector<8x128xf32>
    %cst_28 = arith.constant 1.000000e+00 : f32
    %94 = vector.broadcast %cst_28 : f32 to vector<8x128xf32>
    %95 = arith.addf %94, %93 : vector<8x128xf32>
    %96 = arith.divf %94, %95 : vector<8x128xf32>
    %97 = vector.extract_strided_slice %84 {offsets = [0, 128], sizes = [8, 128], strides = [1, 1]} : vector<8x384xf32> to vector<8x128xf32>
    %98 = vector.extract_strided_slice %88 {offsets = [0, 128], sizes = [8, 128], strides = [1, 1]} : vector<8x384xf32> to vector<8x128xf32>
    %99 = arith.addf %97, %98 : vector<8x128xf32>
    %100 = arith.negf %99 : vector<8x128xf32>
    %101 = math.exp %100 : vector<8x128xf32>
    %cst_29 = arith.constant 1.000000e+00 : f32
    %102 = vector.broadcast %cst_29 : f32 to vector<8x128xf32>
    %103 = arith.addf %102, %101 : vector<8x128xf32>
    %104 = arith.divf %102, %103 : vector<8x128xf32>
    %105 = vector.extract_strided_slice %84 {offsets = [0, 256], sizes = [8, 128], strides = [1, 1]} : vector<8x384xf32> to vector<8x128xf32>
    %106 = vector.extract_strided_slice %88 {offsets = [0, 256], sizes = [8, 128], strides = [1, 1]} : vector<8x384xf32> to vector<8x128xf32>
    %107 = arith.mulf %96, %106 : vector<8x128xf32>
    %108 = arith.addf %105, %107 : vector<8x128xf32>
    %109 = math.tanh %108 : vector<8x128xf32>
    %cst_30 = arith.constant 1.000000e+00 : f32
    %110 = vector.broadcast %cst_30 : f32 to vector<8x128xf32>
    %111 = arith.subf %110, %104 : vector<8x128xf32>
    %112 = arith.mulf %111, %109 : vector<8x128xf32>
    %113 = arith.mulf %104, %83 : vector<8x128xf32>
    %114 = arith.addf %112, %113 : vector<8x128xf32>
    %115 = vector.extract_strided_slice %18 {offsets = [24, 0], sizes = [8, 384], strides = [1, 1]} : vector<64x384xf32> to vector<8x384xf32>
    %116 = arith.truncf %114 : vector<8x128xf32> to vector<8x128xbf16>
    %cst_31 = arith.constant dense<0.000000e+00> : vector<8x384xf32>
    %117 = tpu.matmul %116, %19, %cst_31 {dimension_numbers = #tpu.dot_dimension_numbers<[1], [0], [0], [1], [0, 0, 1, 1], [], []>} : vector<8x128xbf16>, vector<128x384xbf16>, vector<8x384xf32> -> vector<8x384xf32>
    %118 = vector.broadcast %20 : vector<1x384xf32> to vector<8x384xf32>
    %119 = arith.addf %117, %118 : vector<8x384xf32>
    %120 = vector.extract_strided_slice %115 {offsets = [0, 0], sizes = [8, 128], strides = [1, 1]} : vector<8x384xf32> to vector<8x128xf32>
    %121 = vector.extract_strided_slice %119 {offsets = [0, 0], sizes = [8, 128], strides = [1, 1]} : vector<8x384xf32> to vector<8x128xf32>
    %122 = arith.addf %120, %121 : vector<8x128xf32>
    %123 = arith.negf %122 : vector<8x128xf32>
    %124 = math.exp %123 : vector<8x128xf32>
    %cst_32 = arith.constant 1.000000e+00 : f32
    %125 = vector.broadcast %cst_32 : f32 to vector<8x128xf32>
    %126 = arith.addf %125, %124 : vector<8x128xf32>
    %127 = arith.divf %125, %126 : vector<8x128xf32>
    %128 = vector.extract_strided_slice %115 {offsets = [0, 128], sizes = [8, 128], strides = [1, 1]} : vector<8x384xf32> to vector<8x128xf32>
    %129 = vector.extract_strided_slice %119 {offsets = [0, 128], sizes = [8, 128], strides = [1, 1]} : vector<8x384xf32> to vector<8x128xf32>
    %130 = arith.addf %128, %129 : vector<8x128xf32>
    %131 = arith.negf %130 : vector<8x128xf32>
    %132 = math.exp %131 : vector<8x128xf32>
    %cst_33 = arith.constant 1.000000e+00 : f32
    %133 = vector.broadcast %cst_33 : f32 to vector<8x128xf32>
    %134 = arith.addf %133, %132 : vector<8x128xf32>
    %135 = arith.divf %133, %134 : vector<8x128xf32>
    %136 = vector.extract_strided_slice %115 {offsets = [0, 256], sizes = [8, 128], strides = [1, 1]} : vector<8x384xf32> to vector<8x128xf32>
    %137 = vector.extract_strided_slice %119 {offsets = [0, 256], sizes = [8, 128], strides = [1, 1]} : vector<8x384xf32> to vector<8x128xf32>
    %138 = arith.mulf %127, %137 : vector<8x128xf32>
    %139 = arith.addf %136, %138 : vector<8x128xf32>
    %140 = math.tanh %139 : vector<8x128xf32>
    %cst_34 = arith.constant 1.000000e+00 : f32
    %141 = vector.broadcast %cst_34 : f32 to vector<8x128xf32>
    %142 = arith.subf %141, %135 : vector<8x128xf32>
    %143 = arith.mulf %142, %140 : vector<8x128xf32>
    %144 = arith.mulf %135, %114 : vector<8x128xf32>
    %145 = arith.addf %143, %144 : vector<8x128xf32>
    %146 = vector.extract_strided_slice %18 {offsets = [32, 0], sizes = [8, 384], strides = [1, 1]} : vector<64x384xf32> to vector<8x384xf32>
    %147 = arith.truncf %145 : vector<8x128xf32> to vector<8x128xbf16>
    %cst_35 = arith.constant dense<0.000000e+00> : vector<8x384xf32>
    %148 = tpu.matmul %147, %19, %cst_35 {dimension_numbers = #tpu.dot_dimension_numbers<[1], [0], [0], [1], [0, 0, 1, 1], [], []>} : vector<8x128xbf16>, vector<128x384xbf16>, vector<8x384xf32> -> vector<8x384xf32>
    %149 = vector.broadcast %20 : vector<1x384xf32> to vector<8x384xf32>
    %150 = arith.addf %148, %149 : vector<8x384xf32>
    %151 = vector.extract_strided_slice %146 {offsets = [0, 0], sizes = [8, 128], strides = [1, 1]} : vector<8x384xf32> to vector<8x128xf32>
    %152 = vector.extract_strided_slice %150 {offsets = [0, 0], sizes = [8, 128], strides = [1, 1]} : vector<8x384xf32> to vector<8x128xf32>
    %153 = arith.addf %151, %152 : vector<8x128xf32>
    %154 = arith.negf %153 : vector<8x128xf32>
    %155 = math.exp %154 : vector<8x128xf32>
    %cst_36 = arith.constant 1.000000e+00 : f32
    %156 = vector.broadcast %cst_36 : f32 to vector<8x128xf32>
    %157 = arith.addf %156, %155 : vector<8x128xf32>
    %158 = arith.divf %156, %157 : vector<8x128xf32>
    %159 = vector.extract_strided_slice %146 {offsets = [0, 128], sizes = [8, 128], strides = [1, 1]} : vector<8x384xf32> to vector<8x128xf32>
    %160 = vector.extract_strided_slice %150 {offsets = [0, 128], sizes = [8, 128], strides = [1, 1]} : vector<8x384xf32> to vector<8x128xf32>
    %161 = arith.addf %159, %160 : vector<8x128xf32>
    %162 = arith.negf %161 : vector<8x128xf32>
    %163 = math.exp %162 : vector<8x128xf32>
    %cst_37 = arith.constant 1.000000e+00 : f32
    %164 = vector.broadcast %cst_37 : f32 to vector<8x128xf32>
    %165 = arith.addf %164, %163 : vector<8x128xf32>
    %166 = arith.divf %164, %165 : vector<8x128xf32>
    %167 = vector.extract_strided_slice %146 {offsets = [0, 256], sizes = [8, 128], strides = [1, 1]} : vector<8x384xf32> to vector<8x128xf32>
    %168 = vector.extract_strided_slice %150 {offsets = [0, 256], sizes = [8, 128], strides = [1, 1]} : vector<8x384xf32> to vector<8x128xf32>
    %169 = arith.mulf %158, %168 : vector<8x128xf32>
    %170 = arith.addf %167, %169 : vector<8x128xf32>
    %171 = math.tanh %170 : vector<8x128xf32>
    %cst_38 = arith.constant 1.000000e+00 : f32
    %172 = vector.broadcast %cst_38 : f32 to vector<8x128xf32>
    %173 = arith.subf %172, %166 : vector<8x128xf32>
    %174 = arith.mulf %173, %171 : vector<8x128xf32>
    %175 = arith.mulf %166, %145 : vector<8x128xf32>
    %176 = arith.addf %174, %175 : vector<8x128xf32>
    %177 = vector.extract_strided_slice %18 {offsets = [40, 0], sizes = [8, 384], strides = [1, 1]} : vector<64x384xf32> to vector<8x384xf32>
    %178 = arith.truncf %176 : vector<8x128xf32> to vector<8x128xbf16>
    %cst_39 = arith.constant dense<0.000000e+00> : vector<8x384xf32>
    %179 = tpu.matmul %178, %19, %cst_39 {dimension_numbers = #tpu.dot_dimension_numbers<[1], [0], [0], [1], [0, 0, 1, 1], [], []>} : vector<8x128xbf16>, vector<128x384xbf16>, vector<8x384xf32> -> vector<8x384xf32>
    %180 = vector.broadcast %20 : vector<1x384xf32> to vector<8x384xf32>
    %181 = arith.addf %179, %180 : vector<8x384xf32>
    %182 = vector.extract_strided_slice %177 {offsets = [0, 0], sizes = [8, 128], strides = [1, 1]} : vector<8x384xf32> to vector<8x128xf32>
    %183 = vector.extract_strided_slice %181 {offsets = [0, 0], sizes = [8, 128], strides = [1, 1]} : vector<8x384xf32> to vector<8x128xf32>
    %184 = arith.addf %182, %183 : vector<8x128xf32>
    %185 = arith.negf %184 : vector<8x128xf32>
    %186 = math.exp %185 : vector<8x128xf32>
    %cst_40 = arith.constant 1.000000e+00 : f32
    %187 = vector.broadcast %cst_40 : f32 to vector<8x128xf32>
    %188 = arith.addf %187, %186 : vector<8x128xf32>
    %189 = arith.divf %187, %188 : vector<8x128xf32>
    %190 = vector.extract_strided_slice %177 {offsets = [0, 128], sizes = [8, 128], strides = [1, 1]} : vector<8x384xf32> to vector<8x128xf32>
    %191 = vector.extract_strided_slice %181 {offsets = [0, 128], sizes = [8, 128], strides = [1, 1]} : vector<8x384xf32> to vector<8x128xf32>
    %192 = arith.addf %190, %191 : vector<8x128xf32>
    %193 = arith.negf %192 : vector<8x128xf32>
    %194 = math.exp %193 : vector<8x128xf32>
    %cst_41 = arith.constant 1.000000e+00 : f32
    %195 = vector.broadcast %cst_41 : f32 to vector<8x128xf32>
    %196 = arith.addf %195, %194 : vector<8x128xf32>
    %197 = arith.divf %195, %196 : vector<8x128xf32>
    %198 = vector.extract_strided_slice %177 {offsets = [0, 256], sizes = [8, 128], strides = [1, 1]} : vector<8x384xf32> to vector<8x128xf32>
    %199 = vector.extract_strided_slice %181 {offsets = [0, 256], sizes = [8, 128], strides = [1, 1]} : vector<8x384xf32> to vector<8x128xf32>
    %200 = arith.mulf %189, %199 : vector<8x128xf32>
    %201 = arith.addf %198, %200 : vector<8x128xf32>
    %202 = math.tanh %201 : vector<8x128xf32>
    %cst_42 = arith.constant 1.000000e+00 : f32
    %203 = vector.broadcast %cst_42 : f32 to vector<8x128xf32>
    %204 = arith.subf %203, %197 : vector<8x128xf32>
    %205 = arith.mulf %204, %202 : vector<8x128xf32>
    %206 = arith.mulf %197, %176 : vector<8x128xf32>
    %207 = arith.addf %205, %206 : vector<8x128xf32>
    %208 = vector.extract_strided_slice %18 {offsets = [48, 0], sizes = [8, 384], strides = [1, 1]} : vector<64x384xf32> to vector<8x384xf32>
    %209 = arith.truncf %207 : vector<8x128xf32> to vector<8x128xbf16>
    %cst_43 = arith.constant dense<0.000000e+00> : vector<8x384xf32>
    %210 = tpu.matmul %209, %19, %cst_43 {dimension_numbers = #tpu.dot_dimension_numbers<[1], [0], [0], [1], [0, 0, 1, 1], [], []>} : vector<8x128xbf16>, vector<128x384xbf16>, vector<8x384xf32> -> vector<8x384xf32>
    %211 = vector.broadcast %20 : vector<1x384xf32> to vector<8x384xf32>
    %212 = arith.addf %210, %211 : vector<8x384xf32>
    %213 = vector.extract_strided_slice %208 {offsets = [0, 0], sizes = [8, 128], strides = [1, 1]} : vector<8x384xf32> to vector<8x128xf32>
    %214 = vector.extract_strided_slice %212 {offsets = [0, 0], sizes = [8, 128], strides = [1, 1]} : vector<8x384xf32> to vector<8x128xf32>
    %215 = arith.addf %213, %214 : vector<8x128xf32>
    %216 = arith.negf %215 : vector<8x128xf32>
    %217 = math.exp %216 : vector<8x128xf32>
    %cst_44 = arith.constant 1.000000e+00 : f32
    %218 = vector.broadcast %cst_44 : f32 to vector<8x128xf32>
    %219 = arith.addf %218, %217 : vector<8x128xf32>
    %220 = arith.divf %218, %219 : vector<8x128xf32>
    %221 = vector.extract_strided_slice %208 {offsets = [0, 128], sizes = [8, 128], strides = [1, 1]} : vector<8x384xf32> to vector<8x128xf32>
    %222 = vector.extract_strided_slice %212 {offsets = [0, 128], sizes = [8, 128], strides = [1, 1]} : vector<8x384xf32> to vector<8x128xf32>
    %223 = arith.addf %221, %222 : vector<8x128xf32>
    %224 = arith.negf %223 : vector<8x128xf32>
    %225 = math.exp %224 : vector<8x128xf32>
    %cst_45 = arith.constant 1.000000e+00 : f32
    %226 = vector.broadcast %cst_45 : f32 to vector<8x128xf32>
    %227 = arith.addf %226, %225 : vector<8x128xf32>
    %228 = arith.divf %226, %227 : vector<8x128xf32>
    %229 = vector.extract_strided_slice %208 {offsets = [0, 256], sizes = [8, 128], strides = [1, 1]} : vector<8x384xf32> to vector<8x128xf32>
    %230 = vector.extract_strided_slice %212 {offsets = [0, 256], sizes = [8, 128], strides = [1, 1]} : vector<8x384xf32> to vector<8x128xf32>
    %231 = arith.mulf %220, %230 : vector<8x128xf32>
    %232 = arith.addf %229, %231 : vector<8x128xf32>
    %233 = math.tanh %232 : vector<8x128xf32>
    %cst_46 = arith.constant 1.000000e+00 : f32
    %234 = vector.broadcast %cst_46 : f32 to vector<8x128xf32>
    %235 = arith.subf %234, %228 : vector<8x128xf32>
    %236 = arith.mulf %235, %233 : vector<8x128xf32>
    %237 = arith.mulf %228, %207 : vector<8x128xf32>
    %238 = arith.addf %236, %237 : vector<8x128xf32>
    %239 = vector.extract_strided_slice %18 {offsets = [56, 0], sizes = [8, 384], strides = [1, 1]} : vector<64x384xf32> to vector<8x384xf32>
    %240 = arith.truncf %238 : vector<8x128xf32> to vector<8x128xbf16>
    %cst_47 = arith.constant dense<0.000000e+00> : vector<8x384xf32>
    %241 = tpu.matmul %240, %19, %cst_47 {dimension_numbers = #tpu.dot_dimension_numbers<[1], [0], [0], [1], [0, 0, 1, 1], [], []>} : vector<8x128xbf16>, vector<128x384xbf16>, vector<8x384xf32> -> vector<8x384xf32>
    %242 = vector.broadcast %20 : vector<1x384xf32> to vector<8x384xf32>
    %243 = arith.addf %241, %242 : vector<8x384xf32>
    %244 = vector.extract_strided_slice %239 {offsets = [0, 0], sizes = [8, 128], strides = [1, 1]} : vector<8x384xf32> to vector<8x128xf32>
    %245 = vector.extract_strided_slice %243 {offsets = [0, 0], sizes = [8, 128], strides = [1, 1]} : vector<8x384xf32> to vector<8x128xf32>
    %246 = arith.addf %244, %245 : vector<8x128xf32>
    %247 = arith.negf %246 : vector<8x128xf32>
    %248 = math.exp %247 : vector<8x128xf32>
    %cst_48 = arith.constant 1.000000e+00 : f32
    %249 = vector.broadcast %cst_48 : f32 to vector<8x128xf32>
    %250 = arith.addf %249, %248 : vector<8x128xf32>
    %251 = arith.divf %249, %250 : vector<8x128xf32>
    %252 = vector.extract_strided_slice %239 {offsets = [0, 128], sizes = [8, 128], strides = [1, 1]} : vector<8x384xf32> to vector<8x128xf32>
    %253 = vector.extract_strided_slice %243 {offsets = [0, 128], sizes = [8, 128], strides = [1, 1]} : vector<8x384xf32> to vector<8x128xf32>
    %254 = arith.addf %252, %253 : vector<8x128xf32>
    %255 = arith.negf %254 : vector<8x128xf32>
    %256 = math.exp %255 : vector<8x128xf32>
    %cst_49 = arith.constant 1.000000e+00 : f32
    %257 = vector.broadcast %cst_49 : f32 to vector<8x128xf32>
    %258 = arith.addf %257, %256 : vector<8x128xf32>
    %259 = arith.divf %257, %258 : vector<8x128xf32>
    %260 = vector.extract_strided_slice %239 {offsets = [0, 256], sizes = [8, 128], strides = [1, 1]} : vector<8x384xf32> to vector<8x128xf32>
    %261 = vector.extract_strided_slice %243 {offsets = [0, 256], sizes = [8, 128], strides = [1, 1]} : vector<8x384xf32> to vector<8x128xf32>
    %262 = arith.mulf %251, %261 : vector<8x128xf32>
    %263 = arith.addf %260, %262 : vector<8x128xf32>
    %264 = math.tanh %263 : vector<8x128xf32>
    %cst_50 = arith.constant 1.000000e+00 : f32
    %265 = vector.broadcast %cst_50 : f32 to vector<8x128xf32>
    %266 = arith.subf %265, %259 : vector<8x128xf32>
    %267 = arith.mulf %266, %264 : vector<8x128xf32>
    %268 = arith.mulf %259, %238 : vector<8x128xf32>
    %269 = arith.addf %267, %268 : vector<8x128xf32>
    %270 = vector.shape_cast %52 : vector<8x128xf32> to vector<1x8x128xf32>
    %271 = vector.shape_cast %83 : vector<8x128xf32> to vector<1x8x128xf32>
    %272 = vector.shape_cast %114 : vector<8x128xf32> to vector<1x8x128xf32>
    %273 = vector.shape_cast %145 : vector<8x128xf32> to vector<1x8x128xf32>
    %274 = vector.shape_cast %176 : vector<8x128xf32> to vector<1x8x128xf32>
    %275 = vector.shape_cast %207 : vector<8x128xf32> to vector<1x8x128xf32>
    %276 = vector.shape_cast %238 : vector<8x128xf32> to vector<1x8x128xf32>
    %277 = vector.shape_cast %269 : vector<8x128xf32> to vector<1x8x128xf32>
    %278 = tpu.concatenate %270, %271, %272, %273, %274, %275, %276, %277 in 0 : vector<1x8x128xf32>, vector<1x8x128xf32>, vector<1x8x128xf32>, vector<1x8x128xf32>, vector<1x8x128xf32>, vector<1x8x128xf32>, vector<1x8x128xf32>, vector<1x8x128xf32> -> vector<8x8x128xf32>
    %279 = arith.truncf %269 : vector<8x128xf32> to vector<8x128xbf16>
    %c0_51 = arith.constant 0 : index
    %c0_52 = arith.constant 0 : index
    %280 = vector.load %arg8[%c0_51, %c0_52] : memref<128x128xbf16, #tpu.memory_space<vmem>>, vector<128x128xbf16>
    %cst_53 = arith.constant dense<0.000000e+00> : vector<8x128xf32>
    %281 = tpu.matmul %279, %280, %cst_53 {dimension_numbers = #tpu.dot_dimension_numbers<[1], [0], [0], [1], [0, 0, 1, 1], [], []>} : vector<8x128xbf16>, vector<128x128xbf16>, vector<8x128xf32> -> vector<8x128xf32>
    %c0_54 = arith.constant 0 : index
    %c0_55 = arith.constant 0 : index
    %282 = vector.load %arg9[%c0_54, %c0_55] : memref<1x128xf32, #tpu.memory_space<vmem>>, vector<1x128xf32>
    %283 = vector.broadcast %282 : vector<1x128xf32> to vector<8x128xf32>
    %284 = arith.addf %281, %283 : vector<8x128xf32>
    %cst_56 = arith.constant dense<0xFF800000> : vector<8xf32>
    %285 = vector.multi_reduction <maximumf>, %284, %cst_56 [1] : vector<8x128xf32> to vector<8xf32>
    %286 = vector.shape_cast %285 : vector<8xf32> to vector<8x1xf32>
    %287 = vector.broadcast %286 : vector<8x1xf32> to vector<8x128xf32>
    %288 = arith.subf %284, %287 : vector<8x128xf32>
    %289 = math.exp %288 : vector<8x128xf32>
    %cst_57 = arith.constant dense<0.000000e+00> : vector<8xf32>
    %290 = vector.multi_reduction <add>, %289, %cst_57 [1] : vector<8x128xf32> to vector<8xf32>
    %291 = vector.shape_cast %290 : vector<8xf32> to vector<8x1xf32>
    %292 = vector.broadcast %291 : vector<8x1xf32> to vector<8x128xf32>
    %293 = arith.divf %289, %292 : vector<8x128xf32>
    %294 = vector.extract_strided_slice %293 {offsets = [0, 0], sizes = [8, 8], strides = [1, 1]} : vector<8x128xf32> to vector<8x8xf32>
    %295 = tpu.transpose %294, [1, 0] : vector<8x8xf32> -> vector<8x8xf32>
    %296 = vector.shape_cast %295 : vector<8x8xf32> to vector<8x8x1xf32>
    %297 = vector.broadcast %296 : vector<8x8x1xf32> to vector<8x8x128xf32>
    %298 = arith.mulf %297, %278 : vector<8x8x128xf32>
    %cst_58 = arith.constant dense<0.000000e+00> : vector<8x128xf32>
    %299 = vector.multi_reduction <add>, %298, %cst_58 [0] : vector<8x8x128xf32> to vector<8x128xf32>
    %300 = arith.truncf %299 : vector<8x128xf32> to vector<8x128xbf16>
    %c0_59 = arith.constant 0 : index
    %c0_60 = arith.constant 0 : index
    %301 = vector.load %arg10[%c0_59, %c0_60] : memref<128x128xbf16, #tpu.memory_space<vmem>>, vector<128x128xbf16>
    %cst_61 = arith.constant dense<0.000000e+00> : vector<8x128xf32>
    %302 = tpu.matmul %300, %301, %cst_61 {dimension_numbers = #tpu.dot_dimension_numbers<[1], [0], [0], [1], [0, 0, 1, 1], [], []>} : vector<8x128xbf16>, vector<128x128xbf16>, vector<8x128xf32> -> vector<8x128xf32>
    %c0_62 = arith.constant 0 : index
    %c0_63 = arith.constant 0 : index
    %303 = vector.load %arg11[%c0_62, %c0_63] : memref<1x128xf32, #tpu.memory_space<vmem>>, vector<1x128xf32>
    %304 = vector.broadcast %303 : vector<1x128xf32> to vector<8x128xf32>
    %305 = arith.addf %302, %304 : vector<8x128xf32>
    %cst_64 = arith.constant dense<0xFF800000> : vector<8xf32>
    %306 = vector.multi_reduction <maximumf>, %305, %cst_64 [1] : vector<8x128xf32> to vector<8xf32>
    %307 = vector.shape_cast %306 : vector<8xf32> to vector<8x1xf32>
    %308 = vector.broadcast %307 : vector<8x1xf32> to vector<8x128xf32>
    %309 = arith.subf %305, %308 : vector<8x128xf32>
    %310 = math.exp %309 : vector<8x128xf32>
    %cst_65 = arith.constant dense<0.000000e+00> : vector<8xf32>
    %311 = vector.multi_reduction <add>, %310, %cst_65 [1] : vector<8x128xf32> to vector<8xf32>
    %312 = vector.shape_cast %311 : vector<8xf32> to vector<8x1xf32>
    %313 = math.log %312 : vector<8x1xf32>
    %314 = vector.broadcast %313 : vector<8x1xf32> to vector<8x128xf32>
    %315 = arith.subf %309, %314 : vector<8x128xf32>
    %c0_66 = arith.constant 0 : index
    %c0_67 = arith.constant 0 : index
    %316 = vector.load %arg12[%c0_66, %c0_67] : memref<8x128xf32, #tpu.memory_space<vmem>>, vector<8x128xf32>
    tpu.vector_store %arg12[%c0_66, %c0_67], %315 {strides = array<i32>} : memref<8x128xf32, #tpu.memory_space<vmem>>, vector<8x128xf32>,
    return
  }
}

</mosaic_0001>

<llo_original>
// kernel: rnnatt_forward.1
$region0: #{rnnatt_forward.1}
  #allocation0 [shape = 'u32[]', space=smem, size = 0x4, offset = 0x4, fixed_abs, tag = 'smem constant byte address 0x4 - core index']
  #allocation1 [shape = 'u32[144,128]{1,0:T(1,128)}', space=vmem, size = 0x12000, scoped, tag = 'internal scratch']
  %s0 = inlined_call_operand.vmem [shape: f32[64,128], index: 0, kind: input, shape index: {}]
  %s1 = inlined_call_operand.vmem [shape: f32[64,128], index: 1, kind: input, shape index: {}]
  %s2 = inlined_call_operand.vmem [shape: bf16[128,128], index: 2, kind: input, shape index: {}]
  %s3 = inlined_call_operand.vmem [shape: f32[1,128], index: 3, kind: input, shape index: {}]
  %s4 = inlined_call_operand.vmem [shape: bf16[128,384], index: 4, kind: input, shape index: {}]
  %s5 = inlined_call_operand.hbm [shape: bf16[128,384], index: 5, kind: input, shape index: {}]
  %s6 = inlined_call_operand.vmem [shape: f32[1,384], index: 6, kind: input, shape index: {}]
  %s7 = inlined_call_operand.vmem [shape: f32[1,384], index: 7, kind: input, shape index: {}]
  %s8 = inlined_call_operand.hbm [shape: bf16[128,128], index: 8, kind: input, shape index: {}]
  %s9 = inlined_call_operand.vmem [shape: f32[1,128], index: 9, kind: input, shape index: {}]
  %s10 = inlined_call_operand.hbm [shape: bf16[128,128], index: 10, kind: input, shape index: {}]
  %s11 = inlined_call_operand.vmem [shape: f32[1,128], index: 11, kind: input, shape index: {}]
  %s12 = inlined_call_operand.vmem [shape: f32[8,128], index: 12, kind: output, shape index: {}]
  %s13 = sld [smem:[#allocation0]]
  $region70: #{rnnatt_forward.1} parent=0
    _
  %s15 = ssub.s32 1, %s13
  %s16 = scalar_select 0, %s15, %s13
  $region1: #{rnnatt_forward.1} parent=0
    #allocation2 [shape = 'u8[98304]{0}', space=vmem, size = 0x18000, scoped, tag = 'input window, operand 5, single buffered']
    #allocation3 [shape = 's32[1]{0}', space=sflag, size = 0x4, scoped, tag = 'scoped memory for rnnatt_forward.1']
    #allocation4 [shape = 'u8[32768]{0}', space=vmem, size = 0x8000, scoped, tag = 'input window, operand 8, single buffered']
    #allocation5 [shape = 's32[1]{0}', space=sflag, size = 0x4, scoped, tag = 'scoped memory for rnnatt_forward.1']
    #allocation6 [shape = 'u8[32768]{0}', space=vmem, size = 0x8000, scoped, tag = 'input window, operand 10, single buffered']
    %17 = vsyncpa [#allocation3], 0
    %18 = vsyncpa [#allocation5], 0
    // Predicated region
    $region2: #{rnnatt_forward.1} parent=1 // pred_check
      _
    $region3: #{rnnatt_forward.1} parent=1 // pred_check_branch
      %20 = sbr.rel (0) target = $region5
    $region4: #{rnnatt_forward.1} parent=1 // pred_region
      _
    $region5: #{rnnatt_forward.1} parent=1 // pred_fallthru
      _
    // Predicated region
    $region6: #{rnnatt_forward.1} parent=1 // pred_check
      _
    $region7: #{rnnatt_forward.1} parent=1 // pred_check_branch
      %22 = sbr.rel (0) target = $region9
    $region8: #{rnnatt_forward.1} parent=1 // pred_region
      _
    $region9: #{rnnatt_forward.1} parent=1 // pred_fallthru
      _
    // Predicated region
    $region10: #{rnnatt_forward.1} parent=1 // pred_check
      _
    $region11: #{rnnatt_forward.1} parent=1 // pred_check_branch
      %24 = sbr.rel (0) target = $region13
    $region12: #{rnnatt_forward.1} parent=1 // pred_region
      _
    $region13: #{rnnatt_forward.1} parent=1 // pred_fallthru
      _
    // Predicated region
    $region14: #{rnnatt_forward.1} parent=1 // pred_check
      _
    $region15: #{rnnatt_forward.1} parent=1 // pred_check_branch
      %26 = sbr.rel (0) target = $region17
    $region16: #{rnnatt_forward.1} parent=1 // pred_region
      _
    $region17: #{rnnatt_forward.1} parent=1 // pred_fallthru
      _
    // Predicated region
    $region18: #{rnnatt_forward.1} parent=1 // pred_check
      _
    $region19: #{rnnatt_forward.1} parent=1 // pred_check_branch
      %28 = sbr.rel (0) target = $region21
    $region20: #{rnnatt_forward.1} parent=1 // pred_region
      _
    $region21: #{rnnatt_forward.1} parent=1 // pred_fallthru
      _
    // Predicated region
    $region22: #{rnnatt_forward.1} parent=1 // pred_check
      _
    $region23: #{rnnatt_forward.1} parent=1 // pred_check_branch
      %30 = sbr.rel (0) target = $region25
    $region24: #{rnnatt_forward.1} parent=1 // pred_region
      %s32 = ssub.s32 3072, 3072
      %33 = vsyncadd [#allocation3], %s32
      %s34 = sshll.u32 [#allocation2], 4
      %s35 = int_to_ptr.vmem [resolvable:$true] %s34
      %40 = dma.hbm_to_vmem [thread:$0]  %s5, 3072, %s35, [#allocation3], 192, 192, 12
    $region25: #{rnnatt_forward.1} parent=1 // pred_fallthru
      _
    // Predicated region
    $region26: #{rnnatt_forward.1} parent=1 // pred_check
      _
    $region27: #{rnnatt_forward.1} parent=1 // pred_check_branch
      %42 = sbr.rel (0) target = $region29
    $region28: #{rnnatt_forward.1} parent=1 // pred_region
      _
    $region29: #{rnnatt_forward.1} parent=1 // pred_fallthru
      _
    // Predicated region
    $region30: #{rnnatt_forward.1} parent=1 // pred_check
      _
    $region31: #{rnnatt_forward.1} parent=1 // pred_check_branch
      %44 = sbr.rel (0) target = $region33
    $region32: #{rnnatt_forward.1} parent=1 // pred_region
      _
    $region33: #{rnnatt_forward.1} parent=1 // pred_fallthru
      _
    // Predicated region
    $region34: #{rnnatt_forward.1} parent=1 // pred_check
      _
    $region35: #{rnnatt_forward.1} parent=1 // pred_check_branch
      %46 = sbr.rel (0) target = $region37
    $region36: #{rnnatt_forward.1} parent=1 // pred_region
      %s48 = ssub.s32 1024, 1024
      %49 = vsyncadd [#allocation5], %s48
      %s50 = sshll.u32 [#allocation4], 4
      %s51 = int_to_ptr.vmem [resolvable:$true] %s50
      %56 = dma.hbm_to_vmem [thread:$0]  %s8, 1024, %s51, [#allocation5], 64, 64, 4
    $region37: #{rnnatt_forward.1} parent=1 // pred_fallthru
      _
    // Predicated region
    $region38: #{rnnatt_forward.1} parent=1 // pred_check
      _
    $region39: #{rnnatt_forward.1} parent=1 // pred_check_branch
      %58 = sbr.rel (0) target = $region41
    $region40: #{rnnatt_forward.1} parent=1 // pred_region
      _
    $region41: #{rnnatt_forward.1} parent=1 // pred_fallthru
      _
    // Predicated region
    $region42: #{rnnatt_forward.1} parent=1 // pred_check
      _
    $region43: #{rnnatt_forward.1} parent=1 // pred_check_branch
      %60 = sbr.rel (0) target = $region45
    $region44: #{rnnatt_forward.1} parent=1 // pred_region
      %s62 = ssub.s32 1024, 1024
      %63 = vsyncadd [#allocation5], %s62
      %s64 = sshll.u32 [#allocation6], 4
      %s65 = int_to_ptr.vmem [resolvable:$true] %s64
      %70 = dma.hbm_to_vmem [thread:$0]  %s10, 1024, %s65, [#allocation5], 64, 64, 4
    $region45: #{rnnatt_forward.1} parent=1 // pred_fallthru
      _
    // Predicated region
    $region46: #{rnnatt_forward.1} parent=1 // pred_check
      _
    $region47: #{rnnatt_forward.1} parent=1 // pred_check_branch
      %72 = sbr.rel (0) target = $region49
    $region48: #{rnnatt_forward.1} parent=1 // pred_region
      _
    $region49: #{rnnatt_forward.1} parent=1 // pred_fallthru
      _
    // Predicated region
    $region50: #{rnnatt_forward.1} parent=1 // pred_check
      _
    $region51: #{rnnatt_forward.1} parent=1 // pred_check_branch
      %74 = sbr.rel (0) target = $region53
    $region52: #{rnnatt_forward.1} parent=1 // pred_region
      %75 = dma.done [#allocation3], 3072
    $region53: #{rnnatt_forward.1} parent=1 // pred_fallthru
      _
    // Predicated region
    $region54: #{rnnatt_forward.1} parent=1 // pred_check
      _
    $region55: #{rnnatt_forward.1} parent=1 // pred_check_branch
      %77 = sbr.rel (0) target = $region57
    $region56: #{rnnatt_forward.1} parent=1 // pred_region
      %78 = dma.done [#allocation5], 1024
    $region57: #{rnnatt_forward.1} parent=1 // pred_fallthru
      _
    // Predicated region
    $region58: #{rnnatt_forward.1} parent=1 // pred_check
      _
    $region59: #{rnnatt_forward.1} parent=1 // pred_check_branch
      %80 = sbr.rel (0) target = $region61
    $region60: #{rnnatt_forward.1} parent=1 // pred_region
      %81 = dma.done [#allocation5], 1024
    $region61: #{rnnatt_forward.1} parent=1 // pred_fallthru
      _
    %v83 = vld [vmem:[%s0] sm:$0xff]
    %v84 = vld [vmem:[%s0 + $0x8] sm:$0xff]
    %v85 = vld [vmem:[%s0 + $0x10] sm:$0xff]
    %v86 = vld [vmem:[%s0 + $0x18] sm:$0xff]
    %v87 = vld [vmem:[%s0 + $0x20] sm:$0xff]
    %v88 = vld [vmem:[%s0 + $0x28] sm:$0xff]
    %v89 = vld [vmem:[%s0 + $0x30] sm:$0xff]
    %v90 = vld [vmem:[%s0 + $0x38] sm:$0xff]
    %v91 = vld [vmem:[%s1] sm:$0xff]
    %v92 = vld [vmem:[%s1 + $0x8] sm:$0xff]
    %v93 = vld [vmem:[%s1 + $0x10] sm:$0xff]
    %v94 = vld [vmem:[%s1 + $0x18] sm:$0xff]
    %v95 = vld [vmem:[%s1 + $0x20] sm:$0xff]
    %v96 = vld [vmem:[%s1 + $0x28] sm:$0xff]
    %v97 = vld [vmem:[%s1 + $0x30] sm:$0xff]
    %v98 = vld [vmem:[%s1 + $0x38] sm:$0xff]
    %v99 = vmul.f32 %v91, 0.01
    %v100 = vmul.f32 %v92, 0.01
    %v101 = vmul.f32 %v93, 0.01
    %v102 = vmul.f32 %v94, 0.01
    %v103 = vmul.f32 %v95, 0.01
    %v104 = vmul.f32 %v96, 0.01
    %v105 = vmul.f32 %v97, 0.01
    %v106 = vmul.f32 %v98, 0.01
    %v107 = vadd.f32 %v83, %v99
    %v108 = vadd.f32 %v84, %v100
    %v109 = vadd.f32 %v85, %v101
    %v110 = vadd.f32 %v86, %v102
    %v111 = vadd.f32 %v87, %v103
    %v112 = vadd.f32 %v88, %v104
    %v113 = vadd.f32 %v89, %v105
    %v114 = vadd.f32 %v90, %v106
    %v115 = vpack.c.bf16 %v108, %v107
    %v116 = vpack.c.bf16 %v110, %v109
    %v117 = vpack.c.bf16 %v112, %v111
    %v118 = vpack.c.bf16 %v114, %v113
    %v119 = vld [vmem:[%s2] sm:$0xf]
    %v120 = vld [vmem:[%s2 + $0x4] sm:$0xf]
    %v121 = vld [vmem:[%s2 + $0x8] sm:$0xf]
    %v122 = vld [vmem:[%s2 + $0xc] sm:$0xf]
    %v123 = vld [vmem:[%s2 + $0x10] sm:$0xf]
    %v124 = vld [vmem:[%s2 + $0x14] sm:$0xf]
    %v125 = vld [vmem:[%s2 + $0x18] sm:$0xf]
    %v126 = vld [vmem:[%s2 + $0x1c] sm:$0xf]
    %v127 = vld [vmem:[%s2 + $0x20] sm:$0xf]
    %v128 = vld [vmem:[%s2 + $0x24] sm:$0xf]
    %v129 = vld [vmem:[%s2 + $0x28] sm:$0xf]
    %v130 = vld [vmem:[%s2 + $0x2c] sm:$0xf]
    %v131 = vld [vmem:[%s2 + $0x30] sm:$0xf]
    %v132 = vld [vmem:[%s2 + $0x34] sm:$0xf]
    %v133 = vld [vmem:[%s2 + $0x38] sm:$0xf]
    %v134 = vld [vmem:[%s2 + $0x3c] sm:$0xf]
    %v135 = vld [vmem:[%s3] sm:$0x1]
    %v137 = vlaneseq
    %v138 = vshrl.u32 %v137, 7
    %v139 = vsub.s32 0, %v138
    %v140 = vrot.slane %v135, %v139
    %v158 = vunpack.c.l.b16 %v119
    %v159 = vunpack.c.l.b16 %v120
    %v160 = vunpack.c.l.b16 %v121
    %v161 = vunpack.c.l.b16 %v122
    %v162 = vunpack.c.l.b16 %v123
    %v163 = vunpack.c.l.b16 %v124
    %v164 = vunpack.c.l.b16 %v125
    %v165 = vunpack.c.l.b16 %v126
    %v166 = vunpack.c.l.b16 %v127
    %v167 = vunpack.c.l.b16 %v128
    %v168 = vunpack.c.l.b16 %v129
    %v169 = vunpack.c.l.b16 %v130
    %v170 = vunpack.c.l.b16 %v131
    %v171 = vunpack.c.l.b16 %v132
    %v172 = vunpack.c.l.b16 %v133
    %v173 = vunpack.c.l.b16 %v134
    %v174 = vpack.c.b16 %v159, %v158
    %v175 = vpack.c.b16 %v161, %v160
    %v176 = vpack.c.b16 %v163, %v162
    %v177 = vpack.c.b16 %v165, %v164
    %v178 = vpack.c.b16 %v167, %v166
    %v179 = vpack.c.b16 %v169, %v168
    %v180 = vpack.c.b16 %v171, %v170
    %v181 = vpack.c.b16 %v173, %v172
    %190 = vmatprep.subr.bf16.mxu0 0
    %191 = vmatpush1.bf16.msra.mxu0 %v174
    %192 = vmatprep.subr.bf16.mxu0 0
    %193 = vmatpush1.bf16.msra.mxu0 %v175
    %194 = vmatprep.subr.bf16.mxu0 0
    %195 = vmatpush1.bf16.msra.mxu0 %v176
    %196 = vmatprep.subr.bf16.mxu0 0
    %197 = vmatpush1.bf16.msra.mxu0 %v177
    %198 = vmatprep.subr.bf16.mxu0 0
    %199 = vmatpush1.bf16.msra.mxu0 %v178
    %200 = vmatprep.subr.bf16.mxu0 0
    %201 = vmatpush1.bf16.msra.mxu0 %v179
    %202 = vmatprep.subr.bf16.mxu0 0
    %203 = vmatpush1.bf16.msra.mxu0 %v180
    %204 = vmatprep.subr.bf16.mxu0 0
    %205 = vmatpush1.bf16.msra.mxu0 %v181
    %206 = vmatprep.subr.bf16.mxu0 0
    %207 = vmatpush1.bf16.msra.mxu0 0
    %208 = vmatprep.subr.bf16.mxu0 0
    %209 = vmatpush1.bf16.msra.mxu0 0
    %210 = vmatprep.subr.bf16.mxu0 0
    %211 = vmatpush1.bf16.msra.mxu0 0
    %212 = vmatprep.subr.bf16.mxu0 0
    %213 = vmatpush1.bf16.msra.mxu0 0
    %214 = vmatprep.subr.bf16.mxu0 0
    %215 = vmatpush1.bf16.msra.mxu0 0
    %216 = vmatprep.subr.bf16.mxu0 0
    %217 = vmatpush1.bf16.msra.mxu0 0
    %218 = vmatprep.subr.bf16.mxu0 0
    %219 = vmatpush1.bf16.msra.mxu0 0
    %220 = vmatprep.subr.bf16.mxu0 0
    %221 = vmatpush1.bf16.msra.mxu0 0
    %222 = vmatprep.mubr.bf16.mxu0 0
    %223 = vmatmul.mubr.bf16.gmra.mrb[0].mxu0 %v115
    %v224 = vpop.f32.mrb[0].mxu0
    %v225 = vadd.f32 %v140, %v224
    %v226 = vpop.f32.mrb[0].mxu0
    %v227 = vpop.f32.mrb[0].mxu0
    %v228 = vadd.f32 %v140, %v227
    %v229 = vpop.f32.mrb[0].mxu0
    %230 = vmatprep.mubr.bf16.mxu0 0
    %231 = vmatmul.mubr.bf16.gmra.mrb[0].mxu0 %v116
    %v232 = vpop.f32.mrb[0].mxu0
    %v233 = vadd.f32 %v140, %v232
    %v234 = vpop.f32.mrb[0].mxu0
    %v235 = vpop.f32.mrb[0].mxu0
    %v236 = vadd.f32 %v140, %v235
    %v237 = vpop.f32.mrb[0].mxu0
    %238 = vmatprep.mubr.bf16.mxu0 0
    %239 = vmatmul.mubr.bf16.gmra.mrb[0].mxu0 %v117
    %v240 = vpop.f32.mrb[0].mxu0
    %v241 = vadd.f32 %v140, %v240
    %v242 = vpop.f32.mrb[0].mxu0
    %v243 = vpop.f32.mrb[0].mxu0
    %v244 = vadd.f32 %v140, %v243
    %v245 = vpop.f32.mrb[0].mxu0
    %246 = vmatprep.mubr.bf16.mxu0 0
    %247 = vmatmul.mubr.bf16.gmra.mrb[0].mxu0 %v118
    %v248 = vpop.f32.mrb[0].mxu0
    %v249 = vadd.f32 %v140, %v248
    %v250 = vpop.f32.mrb[0].mxu0
    %v251 = vpop.f32.mrb[0].mxu0
    %v252 = vadd.f32 %v140, %v251
    %v253 = vpop.f32.mrb[0].mxu0
    %254 = vdwg.mxu0
    %v255 = vmax.f32 %v225, 0.0
    %v256 = vmax.f32 %v228, 0.0
    %v257 = vmax.f32 %v233, 0.0
    %v258 = vmax.f32 %v236, 0.0
    %v259 = vmax.f32 %v241, 0.0
    %v260 = vmax.f32 %v244, 0.0
    %v261 = vmax.f32 %v249, 0.0
    %v262 = vmax.f32 %v252, 0.0
    %v263 = vpack.c.bf16 %v256, %v255
    %v264 = vpack.c.bf16 %v258, %v257
    %v265 = vpack.c.bf16 %v260, %v259
    %v266 = vpack.c.bf16 %v262, %v261
    %v267 = vld [vmem:[%s4] sm:$0xff]
    %v268 = vld [vmem:[%s4 + $0x8] sm:$0xf]
    %v269 = vld [vmem:[%s4 + $0xc] sm:$0xff]
    %v270 = vld [vmem:[%s4 + $0x14] sm:$0xf]
    %v271 = vld [vmem:[%s4 + $0x18] sm:$0xff]
    %v272 = vld [vmem:[%s4 + $0x20] sm:$0xf]
    %v273 = vld [vmem:[%s4 + $0x24] sm:$0xff]
    %v274 = vld [vmem:[%s4 + $0x2c] sm:$0xf]
    %v275 = vld [vmem:[%s4 + $0x30] sm:$0xff]
    %v276 = vld [vmem:[%s4 + $0x38] sm:$0xf]
    %v277 = vld [vmem:[%s4 + $0x3c] sm:$0xff]
    %v278 = vld [vmem:[%s4 + $0x44] sm:$0xf]
    %v279 = vld [vmem:[%s4 + $0x48] sm:$0xff]
    %v280 = vld [vmem:[%s4 + $0x50] sm:$0xf]
    %v281 = vld [vmem:[%s4 + $0x54] sm:$0xff]
    %v282 = vld [vmem:[%s4 + $0x5c] sm:$0xf]
    %v283 = vld [vmem:[%s4 + $0x60] sm:$0xff]
    %v284 = vld [vmem:[%s4 + $0x68] sm:$0xf]
    %v285 = vld [vmem:[%s4 + $0x6c] sm:$0xff]
    %v286 = vld [vmem:[%s4 + $0x74] sm:$0xf]
    %v287 = vld [vmem:[%s4 + $0x78] sm:$0xff]
    %v288 = vld [vmem:[%s4 + $0x80] sm:$0xf]
    %v289 = vld [vmem:[%s4 + $0x84] sm:$0xff]
    %v290 = vld [vmem:[%s4 + $0x8c] sm:$0xf]
    %v291 = vld [vmem:[%s4 + $0x90] sm:$0xff]
    %v292 = vld [vmem:[%s4 + $0x98] sm:$0xf]
    %v293 = vld [vmem:[%s4 + $0x9c] sm:$0xff]
    %v294 = vld [vmem:[%s4 + $0xa4] sm:$0xf]
    %v295 = vld [vmem:[%s4 + $0xa8] sm:$0xff]
    %v296 = vld [vmem:[%s4 + $0xb0] sm:$0xf]
    %v297 = vld [vmem:[%s4 + $0xb4] sm:$0xff]
    %v298 = vld [vmem:[%s4 + $0xbc] sm:$0xf]
    %v299 = vld [vmem:[%s6] sm:$0x7]
    %v301 = vlaneseq
    %v302 = vshrl.u32 %v301, 7
    %v303 = vsub.s32 0, %v302
    %v304 = vrot.slane %v299, %v303
    %v305 = vlaneseq
    %v306 = vshrl.u32 %v305, 7
    %v307 = vsub.s32 1, %v306
    %v308 = vrot.slane %v299, %v307
    %v309 = vlaneseq
    %v310 = vshrl.u32 %v309, 7
    %v311 = vsub.s32 2, %v310
    %v312 = vrot.slane %v299, %v311
    %v348 = vunpack.c.l.b16 %v267
    %v349 = vunpack.c.h.b16 %v267
    %v350 = vunpack.c.l.b16 %v268
    %v351 = vunpack.c.l.b16 %v269
    %v352 = vunpack.c.h.b16 %v269
    %v353 = vunpack.c.l.b16 %v270
    %v354 = vunpack.c.l.b16 %v271
    %v355 = vunpack.c.h.b16 %v271
    %v356 = vunpack.c.l.b16 %v272
    %v357 = vunpack.c.l.b16 %v273
    %v358 = vunpack.c.h.b16 %v273
    %v359 = vunpack.c.l.b16 %v274
    %v360 = vunpack.c.l.b16 %v275
    %v361 = vunpack.c.h.b16 %v275
    %v362 = vunpack.c.l.b16 %v276
    %v363 = vunpack.c.l.b16 %v277
    %v364 = vunpack.c.h.b16 %v277
    %v365 = vunpack.c.l.b16 %v278
    %v366 = vunpack.c.l.b16 %v279
    %v367 = vunpack.c.h.b16 %v279
    %v368 = vunpack.c.l.b16 %v280
    %v369 = vunpack.c.l.b16 %v281
    %v370 = vunpack.c.h.b16 %v281
    %v371 = vunpack.c.l.b16 %v282
    %v372 = vunpack.c.l.b16 %v283
    %v373 = vunpack.c.h.b16 %v283
    %v374 = vunpack.c.l.b16 %v284
    %v375 = vunpack.c.l.b16 %v285
    %v376 = vunpack.c.h.b16 %v285
    %v377 = vunpack.c.l.b16 %v286
    %v378 = vunpack.c.l.b16 %v287
    %v379 = vunpack.c.h.b16 %v287
    %v380 = vunpack.c.l.b16 %v288
    %v381 = vunpack.c.l.b16 %v289
    %v382 = vunpack.c.h.b16 %v289
    %v383 = vunpack.c.l.b16 %v290
    %v384 = vunpack.c.l.b16 %v291
    %v385 = vunpack.c.h.b16 %v291
    %v386 = vunpack.c.l.b16 %v292
    %v387 = vunpack.c.l.b16 %v293
    %v388 = vunpack.c.h.b16 %v293
    %v389 = vunpack.c.l.b16 %v294
    %v390 = vunpack.c.l.b16 %v295
    %v391 = vunpack.c.h.b16 %v295
    %v392 = vunpack.c.l.b16 %v296
    %v393 = vunpack.c.l.b16 %v297
    %v394 = vunpack.c.h.b16 %v297
    %v395 = vunpack.c.l.b16 %v298
    %v396 = vpack.c.b16 %v351, %v348
    %v397 = vpack.c.b16 %v352, %v349
    %v398 = vpack.c.b16 %v353, %v350
    %v399 = vpack.c.b16 %v357, %v354
    %v400 = vpack.c.b16 %v358, %v355
    %v401 = vpack.c.b16 %v359, %v356
    %v402 = vpack.c.b16 %v363, %v360
    %v403 = vpack.c.b16 %v364, %v361
    %v404 = vpack.c.b16 %v365, %v362
    %v405 = vpack.c.b16 %v369, %v366
    %v406 = vpack.c.b16 %v370, %v367
    %v407 = vpack.c.b16 %v371, %v368
    %v408 = vpack.c.b16 %v375, %v372
    %v409 = vpack.c.b16 %v376, %v373
    %v410 = vpack.c.b16 %v377, %v374
    %v411 = vpack.c.b16 %v381, %v378
    %v412 = vpack.c.b16 %v382, %v379
    %v413 = vpack.c.b16 %v383, %v380
    %v414 = vpack.c.b16 %v387, %v384
    %v415 = vpack.c.b16 %v388, %v385
    %v416 = vpack.c.b16 %v389, %v386
    %v417 = vpack.c.b16 %v393, %v390
    %v418 = vpack.c.b16 %v394, %v391
    %v419 = vpack.c.b16 %v395, %v392
    %444 = vmatprep.subr.bf16.mxu0 %v397
    %445 = vmatpush1.bf16.msra.mxu0 %v396
    %446 = vmatprep.subr.bf16.mxu0 %v400
    %447 = vmatpush1.bf16.msra.mxu0 %v399
    %448 = vmatprep.subr.bf16.mxu0 %v403
    %449 = vmatpush1.bf16.msra.mxu0 %v402
    %450 = vmatprep.subr.bf16.mxu0 %v406
    %451 = vmatpush1.bf16.msra.mxu0 %v405
    %452 = vmatprep.subr.bf16.mxu0 %v409
    %453 = vmatpush1.bf16.msra.mxu0 %v408
    %454 = vmatprep.subr.bf16.mxu0 %v412
    %455 = vmatpush1.bf16.msra.mxu0 %v411
    %456 = vmatprep.subr.bf16.mxu0 %v415
    %457 = vmatpush1.bf16.msra.mxu0 %v414
    %458 = vmatprep.subr.bf16.mxu0 %v418
    %459 = vmatpush1.bf16.msra.mxu0 %v417
    %460 = vmatprep.subr.bf16.mxu0 0
    %461 = vmatpush1.bf16.msra.mxu0 0
    %462 = vmatprep.subr.bf16.mxu0 0
    %463 = vmatpush1.bf16.msra.mxu0 0
    %464 = vmatprep.subr.bf16.mxu0 0
    %465 = vmatpush1.bf16.msra.mxu0 0
    %466 = vmatprep.subr.bf16.mxu0 0
    %467 = vmatpush1.bf16.msra.mxu0 0
    %468 = vmatprep.subr.bf16.mxu0 0
    %469 = vmatpush1.bf16.msra.mxu0 0
    %470 = vmatprep.subr.bf16.mxu0 0
    %471 = vmatpush1.bf16.msra.mxu0 0
    %472 = vmatprep.subr.bf16.mxu0 0
    %473 = vmatpush1.bf16.msra.mxu0 0
    %474 = vmatprep.subr.bf16.mxu0 0
    %475 = vmatpush1.bf16.msra.mxu0 0
    %476 = vmatprep.mubr.bf16.mxu0 0
    %477 = vmatmul.mubr.bf16.gmra.mrb[0].mxu0 %v263
    %v478 = vpop.f32.mrb[0].mxu0
    %v479 = vadd.f32 %v304, %v478
    %v480 = vpop.f32.mrb[0].mxu0
    %v481 = vadd.f32 %v308, %v480
    %v482 = vpop.f32.mrb[0].mxu0
    %v483 = vadd.f32 %v304, %v482
    %v484 = vpop.f32.mrb[0].mxu0
    %v485 = vadd.f32 %v308, %v484
    %486 = vmatprep.mubr.bf16.mxu0 0
    %487 = vmatmul.mubr.bf16.gmra.mrb[0].mxu0 %v264
    %v488 = vpop.f32.mrb[0].mxu0
    %v489 = vadd.f32 %v304, %v488
    %v490 = vpop.f32.mrb[0].mxu0
    %v491 = vadd.f32 %v308, %v490
    %v492 = vpop.f32.mrb[0].mxu0
    %v493 = vadd.f32 %v304, %v492
    %v494 = vpop.f32.mrb[0].mxu0
    %v495 = vadd.f32 %v308, %v494
    %496 = vmatprep.mubr.bf16.mxu0 0
    %497 = vmatmul.mubr.bf16.gmra.mrb[0].mxu0 %v265
    %v498 = vpop.f32.mrb[0].mxu0
    %v499 = vadd.f32 %v304, %v498
    %v500 = vpop.f32.mrb[0].mxu0
    %v501 = vadd.f32 %v308, %v500
    %v502 = vpop.f32.mrb[0].mxu0
    %v503 = vadd.f32 %v304, %v502
    %v504 = vpop.f32.mrb[0].mxu0
    %v505 = vadd.f32 %v308, %v504
    %506 = vmatprep.mubr.bf16.mxu0 0
    %507 = vmatmul.mubr.bf16.gmra.mrb[0].mxu0 %v266
    %v508 = vpop.f32.mrb[0].mxu0
    %v509 = vadd.f32 %v304, %v508
    %v510 = vpop.f32.mrb[0].mxu0
    %v511 = vadd.f32 %v308, %v510
    %v512 = vpop.f32.mrb[0].mxu0
    %v513 = vadd.f32 %v304, %v512
    %v514 = vpop.f32.mrb[0].mxu0
    %v515 = vadd.f32 %v308, %v514
    %516 = vdwg.mxu0
    %517 = vmatprep.subr.bf16.mxu0 0
    %518 = vmatpush1.bf16.msra.mxu0 %v398
    %519 = vmatprep.subr.bf16.mxu0 0
    %520 = vmatpush1.bf16.msra.mxu0 %v401
    %521 = vmatprep.subr.bf16.mxu0 0
    %522 = vmatpush1.bf16.msra.mxu0 %v404
    %523 = vmatprep.subr.bf16.mxu0 0
    %524 = vmatpush1.bf16.msra.mxu0 %v407
    %525 = vmatprep.subr.bf16.mxu0 0
    %526 = vmatpush1.bf16.msra.mxu0 %v410
    %527 = vmatprep.subr.bf16.mxu0 0
    %528 = vmatpush1.bf16.msra.mxu0 %v413
    %529 = vmatprep.subr.bf16.mxu0 0
    %530 = vmatpush1.bf16.msra.mxu0 %v416
    %531 = vmatprep.subr.bf16.mxu0 0
    %532 = vmatpush1.bf16.msra.mxu0 %v419
    %533 = vmatprep.subr.bf16.mxu0 0
    %534 = vmatpush1.bf16.msra.mxu0 0
    %535 = vmatprep.subr.bf16.mxu0 0
    %536 = vmatpush1.bf16.msra.mxu0 0
    %537 = vmatprep.subr.bf16.mxu0 0
    %538 = vmatpush1.bf16.msra.mxu0 0
    %539 = vmatprep.subr.bf16.mxu0 0
    %540 = vmatpush1.bf16.msra.mxu0 0
    %541 = vmatprep.subr.bf16.mxu0 0
    %542 = vmatpush1.bf16.msra.mxu0 0
    %543 = vmatprep.subr.bf16.mxu0 0
    %544 = vmatpush1.bf16.msra.mxu0 0
    %545 = vmatprep.subr.bf16.mxu0 0
    %546 = vmatpush1.bf16.msra.mxu0 0
    %547 = vmatprep.subr.bf16.mxu0 0
    %548 = vmatpush1.bf16.msra.mxu0 0
    %549 = vmatprep.mubr.bf16.mxu0 0
    %550 = vmatmul.mubr.bf16.gmra.mrb[0].mxu0 %v263
    %v551 = vpop.f32.mrb[0].mxu0
    %v552 = vadd.f32 %v312, %v551
    %v553 = vpop.f32.mrb[0].mxu0
    %v554 = vpop.f32.mrb[0].mxu0
    %v555 = vadd.f32 %v312, %v554
    %v556 = vpop.f32.mrb[0].mxu0
    %557 = vmatprep.mubr.bf16.mxu0 0
    %558 = vmatmul.mubr.bf16.gmra.mrb[0].mxu0 %v264
    %v559 = vpop.f32.mrb[0].mxu0
    %v560 = vadd.f32 %v312, %v559
    %v561 = vpop.f32.mrb[0].mxu0
    %v562 = vpop.f32.mrb[0].mxu0
    %v563 = vadd.f32 %v312, %v562
    %v564 = vpop.f32.mrb[0].mxu0
    %565 = vmatprep.mubr.bf16.mxu0 0
    %566 = vmatmul.mubr.bf16.gmra.mrb[0].mxu0 %v265
    %v567 = vpop.f32.mrb[0].mxu0
    %v568 = vadd.f32 %v312, %v567
    %v569 = vpop.f32.mrb[0].mxu0
    %v570 = vpop.f32.mrb[0].mxu0
    %v571 = vadd.f32 %v312, %v570
    %v572 = vpop.f32.mrb[0].mxu0
    %573 = vmatprep.mubr.bf16.mxu0 0
    %574 = vmatmul.mubr.bf16.gmra.mrb[0].mxu0 %v266
    %v575 = vpop.f32.mrb[0].mxu0
    %v576 = vadd.f32 %v312, %v575
    %v577 = vpop.f32.mrb[0].mxu0
    %v578 = vpop.f32.mrb[0].mxu0
    %v579 = vadd.f32 %v312, %v578
    %v580 = vpop.f32.mrb[0].mxu0
    %581 = vdwg.mxu0
    %v582 = vld [vmem:[#allocation2] sm:$0xff]
    %v583 = vld [vmem:[#allocation2 + $0x8] sm:$0xf]
    %v584 = vld [vmem:[#allocation2 + $0xc] sm:$0xff]
    %v585 = vld [vmem:[#allocation2 + $0x14] sm:$0xf]
    %v586 = vld [vmem:[#allocation2 + $0x18] sm:$0xff]
    %v587 = vld [vmem:[#allocation2 + $0x20] sm:$0xf]
    %v588 = vld [vmem:[#allocation2 + $0x24] sm:$0xff]
    %v589 = vld [vmem:[#allocation2 + $0x2c] sm:$0xf]
    %v590 = vld [vmem:[#allocation2 + $0x30] sm:$0xff]
    %v591 = vld [vmem:[#allocation2 + $0x38] sm:$0xf]
    %v592 = vld [vmem:[#allocation2 + $0x3c] sm:$0xff]
    %v593 = vld [vmem:[#allocation2 + $0x44] sm:$0xf]
    %v594 = vld [vmem:[#allocation2 + $0x48] sm:$0xff]
    %v595 = vld [vmem:[#allocation2 + $0x50] sm:$0xf]
    %v596 = vld [vmem:[#allocation2 + $0x54] sm:$0xff]
    %v597 = vld [vmem:[#allocation2 + $0x5c] sm:$0xf]
    %v598 = vld [vmem:[#allocation2 + $0x60] sm:$0xff]
    %v599 = vld [vmem:[#allocation2 + $0x68] sm:$0xf]
    %v600 = vld [vmem:[#allocation2 + $0x6c] sm:$0xff]
    %v601 = vld [vmem:[#allocation2 + $0x74] sm:$0xf]
    %v602 = vld [vmem:[#allocation2 + $0x78] sm:$0xff]
    %v603 = vld [vmem:[#allocation2 + $0x80] sm:$0xf]
    %v604 = vld [vmem:[#allocation2 + $0x84] sm:$0xff]
    %v605 = vld [vmem:[#allocation2 + $0x8c] sm:$0xf]
    %v606 = vld [vmem:[#allocation2 + $0x90] sm:$0xff]
    %v607 = vld [vmem:[#allocation2 + $0x98] sm:$0xf]
    %v608 = vld [vmem:[#allocation2 + $0x9c] sm:$0xff]
    %v609 = vld [vmem:[#allocation2 + $0xa4] sm:$0xf]
    %v610 = vld [vmem:[#allocation2 + $0xa8] sm:$0xff]
    %v611 = vld [vmem:[#allocation2 + $0xb0] sm:$0xf]
    %v612 = vld [vmem:[#allocation2 + $0xb4] sm:$0xff]
    %v613 = vld [vmem:[#allocation2 + $0xbc] sm:$0xf]
    %v614 = vld [vmem:[%s7] sm:$0x7]
    %v616 = vlaneseq
    %v617 = vshrl.u32 %v616, 7
    %v618 = vsub.s32 0, %v617
    %v619 = vrot.slane %v614, %v618
    %v620 = vlaneseq
    %v621 = vshrl.u32 %v620, 7
    %v622 = vsub.s32 1, %v621
    %v623 = vrot.slane %v614, %v622
    %v624 = vlaneseq
    %v625 = vshrl.u32 %v624, 7
    %v626 = vsub.s32 2, %v625
    %v627 = vrot.slane %v614, %v626
    %v663 = vunpack.c.l.b16 %v582
    %v664 = vunpack.c.h.b16 %v582
    %v665 = vunpack.c.l.b16 %v583
    %v666 = vunpack.c.l.b16 %v584
    %v667 = vunpack.c.h.b16 %v584
    %v668 = vunpack.c.l.b16 %v585
    %v669 = vunpack.c.l.b16 %v586
    %v670 = vunpack.c.h.b16 %v586
    %v671 = vunpack.c.l.b16 %v587
    %v672 = vunpack.c.l.b16 %v588
    %v673 = vunpack.c.h.b16 %v588
    %v674 = vunpack.c.l.b16 %v589
    %v675 = vunpack.c.l.b16 %v590
    %v676 = vunpack.c.h.b16 %v590
    %v677 = vunpack.c.l.b16 %v591
    %v678 = vunpack.c.l.b16 %v592
    %v679 = vunpack.c.h.b16 %v592
    %v680 = vunpack.c.l.b16 %v593
    %v681 = vunpack.c.l.b16 %v594
    %v682 = vunpack.c.h.b16 %v594
    %v683 = vunpack.c.l.b16 %v595
    %v684 = vunpack.c.l.b16 %v596
    %v685 = vunpack.c.h.b16 %v596
    %v686 = vunpack.c.l.b16 %v597
    %v687 = vunpack.c.l.b16 %v598
    %v688 = vunpack.c.h.b16 %v598
    %v689 = vunpack.c.l.b16 %v599
    %v690 = vunpack.c.l.b16 %v600
    %v691 = vunpack.c.h.b16 %v600
    %v692 = vunpack.c.l.b16 %v601
    %v693 = vunpack.c.l.b16 %v602
    %v694 = vunpack.c.h.b16 %v602
    %v695 = vunpack.c.l.b16 %v603
    %v696 = vunpack.c.l.b16 %v604
    %v697 = vunpack.c.h.b16 %v604
    %v698 = vunpack.c.l.b16 %v605
    %v699 = vunpack.c.l.b16 %v606
    %v700 = vunpack.c.h.b16 %v606
    %v701 = vunpack.c.l.b16 %v607
    %v702 = vunpack.c.l.b16 %v608
    %v703 = vunpack.c.h.b16 %v608
    %v704 = vunpack.c.l.b16 %v609
    %v705 = vunpack.c.l.b16 %v610
    %v706 = vunpack.c.h.b16 %v610
    %v707 = vunpack.c.l.b16 %v611
    %v708 = vunpack.c.l.b16 %v612
    %v709 = vunpack.c.h.b16 %v612
    %v710 = vunpack.c.l.b16 %v613
    %v711 = vpack.c.b16 %v666, %v663
    %v712 = vpack.c.b16 %v667, %v664
    %v713 = vpack.c.b16 %v668, %v665
    %v714 = vpack.c.b16 %v672, %v669
    %v715 = vpack.c.b16 %v673, %v670
    %v716 = vpack.c.b16 %v674, %v671
    %v717 = vpack.c.b16 %v678, %v675
    %v718 = vpack.c.b16 %v679, %v676
    %v719 = vpack.c.b16 %v680, %v677
    %v720 = vpack.c.b16 %v684, %v681
    %v721 = vpack.c.b16 %v685, %v682
    %v722 = vpack.c.b16 %v686, %v683
    %v723 = vpack.c.b16 %v690, %v687
    %v724 = vpack.c.b16 %v691, %v688
    %v725 = vpack.c.b16 %v692, %v689
    %v726 = vpack.c.b16 %v696, %v693
    %v727 = vpack.c.b16 %v697, %v694
    %v728 = vpack.c.b16 %v698, %v695
    %v729 = vpack.c.b16 %v702, %v699
    %v730 = vpack.c.b16 %v703, %v700
    %v731 = vpack.c.b16 %v704, %v701
    %v732 = vpack.c.b16 %v708, %v705
    %v733 = vpack.c.b16 %v709, %v706
    %v734 = vpack.c.b16 %v710, %v707
    %759 = vmatprep.subr.bf16.mxu0 %v712
    %760 = vmatpush1.bf16.msra.mxu0 %v711
    %761 = vmatprep.subr.bf16.mxu0 %v715
    %762 = vmatpush1.bf16.msra.mxu0 %v714
    %763 = vmatprep.subr.bf16.mxu0 %v718
    %764 = vmatpush1.bf16.msra.mxu0 %v717
    %765 = vmatprep.subr.bf16.mxu0 %v721
    %766 = vmatpush1.bf16.msra.mxu0 %v720
    %767 = vmatprep.subr.bf16.mxu0 %v724
    %768 = vmatpush1.bf16.msra.mxu0 %v723
    %769 = vmatprep.subr.bf16.mxu0 %v727
    %770 = vmatpush1.bf16.msra.mxu0 %v726
    %771 = vmatprep.subr.bf16.mxu0 %v730
    %772 = vmatpush1.bf16.msra.mxu0 %v729
    %773 = vmatprep.subr.bf16.mxu0 %v733
    %774 = vmatpush1.bf16.msra.mxu0 %v732
    %775 = vmatprep.subr.bf16.mxu0 0
    %776 = vmatpush1.bf16.msra.mxu0 0
    %777 = vmatprep.subr.bf16.mxu0 0
    %778 = vmatpush1.bf16.msra.mxu0 0
    %779 = vmatprep.subr.bf16.mxu0 0
    %780 = vmatpush1.bf16.msra.mxu0 0
    %781 = vmatprep.subr.bf16.mxu0 0
    %782 = vmatpush1.bf16.msra.mxu0 0
    %783 = vmatprep.subr.bf16.mxu0 0
    %784 = vmatpush1.bf16.msra.mxu0 0
    %785 = vmatprep.subr.bf16.mxu0 0
    %786 = vmatpush1.bf16.msra.mxu0 0
    %787 = vmatprep.subr.bf16.mxu0 0
    %788 = vmatpush1.bf16.msra.mxu0 0
    %789 = vmatprep.subr.bf16.mxu0 0
    %790 = vmatpush1.bf16.msra.mxu0 0
    %791 = vmatprep.mubr.bf16.mxu0 0
    %792 = vmatmul.mubr.bf16.gmra.mrb[0].mxu0 0
    %v793 = vpop.f32.mrb[0].mxu0
    %v794 = vadd.f32 %v619, %v793
    %v795 = vpop.f32.mrb[0].mxu0
    %v796 = vadd.f32 %v623, %v795
    %v797 = vpop.f32.mrb[0].mxu0
    %v798 = vpop.f32.mrb[0].mxu0
    %799 = vdwg.mxu0
    %800 = vmatprep.subr.bf16.mxu0 0
    %801 = vmatpush1.bf16.msra.mxu0 %v713
    %802 = vmatprep.subr.bf16.mxu0 0
    %803 = vmatpush1.bf16.msra.mxu0 %v716
    %804 = vmatprep.subr.bf16.mxu0 0
    %805 = vmatpush1.bf16.msra.mxu0 %v719
    %806 = vmatprep.subr.bf16.mxu0 0
    %807 = vmatpush1.bf16.msra.mxu0 %v722
    %808 = vmatprep.subr.bf16.mxu0 0
    %809 = vmatpush1.bf16.msra.mxu0 %v725
    %810 = vmatprep.subr.bf16.mxu0 0
    %811 = vmatpush1.bf16.msra.mxu0 %v728
    %812 = vmatprep.subr.bf16.mxu0 0
    %813 = vmatpush1.bf16.msra.mxu0 %v731
    %814 = vmatprep.subr.bf16.mxu0 0
    %815 = vmatpush1.bf16.msra.mxu0 %v734
    %816 = vmatprep.subr.bf16.mxu0 0
    %817 = vmatpush1.bf16.msra.mxu0 0
    %818 = vmatprep.subr.bf16.mxu0 0
    %819 = vmatpush1.bf16.msra.mxu0 0
    %820 = vmatprep.subr.bf16.mxu0 0
    %821 = vmatpush1.bf16.msra.mxu0 0
    %822 = vmatprep.subr.bf16.mxu0 0
    %823 = vmatpush1.bf16.msra.mxu0 0
    %824 = vmatprep.subr.bf16.mxu0 0
    %825 = vmatpush1.bf16.msra.mxu0 0
    %826 = vmatprep.subr.bf16.mxu0 0
    %827 = vmatpush1.bf16.msra.mxu0 0
    %828 = vmatprep.subr.bf16.mxu0 0
    %829 = vmatpush1.bf16.msra.mxu0 0
    %830 = vmatprep.subr.bf16.mxu0 0
    %831 = vmatpush1.bf16.msra.mxu0 0
    %832 = vmatprep.mubr.bf16.mxu0 0
    %833 = vmatmul.mubr.bf16.gmra.mrb[0].mxu0 0
    %v834 = vpop.f32.mrb[0].mxu0
    %v835 = vadd.f32 %v627, %v834
    %v836 = vpop.f32.mrb[0].mxu0
    %v837 = vpop.f32.mrb[0].mxu0
    %v838 = vpop.f32.mrb[0].mxu0
    %839 = vdwg.mxu0
    %v840 = vadd.f32 %v479, %v794
    %v841 = vxor.u32 %v840, 2147483648
    %v842 = vmul.f32 %v841, 1.442695
    %v843 = vpow.pop %v842
    %v844 = vadd.f32 %v843, 1.0
    %v845 = vrcp.pop %v844
    %v846 = vmul.f32 1.0, %v845
    %v847 = vadd.f32 %v481, %v796
    %v848 = vxor.u32 %v847, 2147483648
    %v849 = vmul.f32 %v848, 1.442695
    %v850 = vpow.pop %v849
    %v851 = vadd.f32 %v850, 1.0
    %v852 = vrcp.pop %v851
    %v853 = vmul.f32 1.0, %v852
    %v854 = vmul.f32 %v846, %v835
    %v855 = vadd.f32 %v552, %v854
    %v856 = vtanh.pop %v855
    %v857 = vsub.f32 1.0, %v853
    %v858 = vmul.f32 %v857, %v856
    %v859 = vmul.f32 %v853, 0.0
    %v860 = vadd.f32 %v858, %v859
    %v861 = vpack.c.bf16 %v860, %v860
    %862 = vmatprep.subr.bf16.mxu0 %v712
    %863 = vmatpush1.bf16.msra.mxu0 %v711
    %864 = vmatprep.subr.bf16.mxu0 %v715
    %865 = vmatpush1.bf16.msra.mxu0 %v714
    %866 = vmatprep.subr.bf16.mxu0 %v718
    %867 = vmatpush1.bf16.msra.mxu0 %v717
    %868 = vmatprep.subr.bf16.mxu0 %v721
    %869 = vmatpush1.bf16.msra.mxu0 %v720
    %870 = vmatprep.subr.bf16.mxu0 %v724
    %871 = vmatpush1.bf16.msra.mxu0 %v723
    %872 = vmatprep.subr.bf16.mxu0 %v727
    %873 = vmatpush1.bf16.msra.mxu0 %v726
    %874 = vmatprep.subr.bf16.mxu0 %v730
    %875 = vmatpush1.bf16.msra.mxu0 %v729
    %876 = vmatprep.subr.bf16.mxu0 %v733
    %877 = vmatpush1.bf16.msra.mxu0 %v732
    %878 = vmatprep.subr.bf16.mxu0 0
    %879 = vmatpush1.bf16.msra.mxu0 0
    %880 = vmatprep.subr.bf16.mxu0 0
    %881 = vmatpush1.bf16.msra.mxu0 0
    %882 = vmatprep.subr.bf16.mxu0 0
    %883 = vmatpush1.bf16.msra.mxu0 0
    %884 = vmatprep.subr.bf16.mxu0 0
    %885 = vmatpush1.bf16.msra.mxu0 0
    %886 = vmatprep.subr.bf16.mxu0 0
    %887 = vmatpush1.bf16.msra.mxu0 0
    %888 = vmatprep.subr.bf16.mxu0 0
    %889 = vmatpush1.bf16.msra.mxu0 0
    %890 = vmatprep.subr.bf16.mxu0 0
    %891 = vmatpush1.bf16.msra.mxu0 0
    %892 = vmatprep.subr.bf16.mxu0 0
    %893 = vmatpush1.bf16.msra.mxu0 0
    %894 = vmatprep.mubr.bf16.mxu0 0
    %895 = vmatmul.mubr.bf16.gmra.mrb[0].mxu0 %v861
    %v896 = vpop.f32.mrb[0].mxu0
    %v897 = vadd.f32 %v619, %v896
    %v898 = vpop.f32.mrb[0].mxu0
    %v899 = vadd.f32 %v623, %v898
    %v900 = vpop.f32.mrb[0].mxu0
    %v901 = vpop.f32.mrb[0].mxu0
    %902 = vdwg.mxu0
    %903 = vmatprep.subr.bf16.mxu0 0
    %904 = vmatpush1.bf16.msra.mxu0 %v713
    %905 = vmatprep.subr.bf16.mxu0 0
    %906 = vmatpush1.bf16.msra.mxu0 %v716
    %907 = vmatprep.subr.bf16.mxu0 0
    %908 = vmatpush1.bf16.msra.mxu0 %v719
    %909 = vmatprep.subr.bf16.mxu0 0
    %910 = vmatpush1.bf16.msra.mxu0 %v722
    %911 = vmatprep.subr.bf16.mxu0 0
    %912 = vmatpush1.bf16.msra.mxu0 %v725
    %913 = vmatprep.subr.bf16.mxu0 0
    %914 = vmatpush1.bf16.msra.mxu0 %v728
    %915 = vmatprep.subr.bf16.mxu0 0
    %916 = vmatpush1.bf16.msra.mxu0 %v731
    %917 = vmatprep.subr.bf16.mxu0 0
    %918 = vmatpush1.bf16.msra.mxu0 %v734
    %919 = vmatprep.subr.bf16.mxu0 0
    %920 = vmatpush1.bf16.msra.mxu0 0
    %921 = vmatprep.subr.bf16.mxu0 0
    %922 = vmatpush1.bf16.msra.mxu0 0
    %923 = vmatprep.subr.bf16.mxu0 0
    %924 = vmatpush1.bf16.msra.mxu0 0
    %925 = vmatprep.subr.bf16.mxu0 0
    %926 = vmatpush1.bf16.msra.mxu0 0
    %927 = vmatprep.subr.bf16.mxu0 0
    %928 = vmatpush1.bf16.msra.mxu0 0
    %929 = vmatprep.subr.bf16.mxu0 0
    %930 = vmatpush1.bf16.msra.mxu0 0
    %931 = vmatprep.subr.bf16.mxu0 0
    %932 = vmatpush1.bf16.msra.mxu0 0
    %933 = vmatprep.subr.bf16.mxu0 0
    %934 = vmatpush1.bf16.msra.mxu0 0
    %935 = vmatprep.mubr.bf16.mxu0 0
    %936 = vmatmul.mubr.bf16.gmra.mrb[0].mxu0 %v861
    %v937 = vpop.f32.mrb[0].mxu0
    %v938 = vadd.f32 %v627, %v937
    %v939 = vpop.f32.mrb[0].mxu0
    %v940 = vpop.f32.mrb[0].mxu0
    %v941 = vpop.f32.mrb[0].mxu0
    %942 = vdwg.mxu0
    %v943 = vadd.f32 %v483, %v897
    %v944 = vxor.u32 %v943, 2147483648
    %v945 = vmul.f32 %v944, 1.442695
    %v946 = vpow.pop %v945
    %v947 = vadd.f32 %v946, 1.0
    %v948 = vrcp.pop %v947
    %v949 = vmul.f32 1.0, %v948
    %v950 = vadd.f32 %v485, %v899
    %v951 = vxor.u32 %v950, 2147483648
    %v952 = vmul.f32 %v951, 1.442695
    %v953 = vpow.pop %v952
    %v954 = vadd.f32 %v953, 1.0
    %v955 = vrcp.pop %v954
    %v956 = vmul.f32 1.0, %v955
    %v957 = vmul.f32 %v949, %v938
    %v958 = vadd.f32 %v555, %v957
    %v959 = vtanh.pop %v958
    %v960 = vsub.f32 1.0, %v956
    %v961 = vmul.f32 %v960, %v959
    %v962 = vmul.f32 %v956, %v860
    %v963 = vadd.f32 %v961, %v962
    %v964 = vpack.c.bf16 %v963, %v963
    %965 = vmatprep.subr.bf16.mxu0 %v712
    %966 = vmatpush1.bf16.msra.mxu0 %v711
    %967 = vmatprep.subr.bf16.mxu0 %v715
    %968 = vmatpush1.bf16.msra.mxu0 %v714
    %969 = vmatprep.subr.bf16.mxu0 %v718
    %970 = vmatpush1.bf16.msra.mxu0 %v717
    %971 = vmatprep.subr.bf16.mxu0 %v721
    %972 = vmatpush1.bf16.msra.mxu0 %v720
    %973 = vmatprep.subr.bf16.mxu0 %v724
    %974 = vmatpush1.bf16.msra.mxu0 %v723
    %975 = vmatprep.subr.bf16.mxu0 %v727
    %976 = vmatpush1.bf16.msra.mxu0 %v726
    %977 = vmatprep.subr.bf16.mxu0 %v730
    %978 = vmatpush1.bf16.msra.mxu0 %v729
    %979 = vmatprep.subr.bf16.mxu0 %v733
    %980 = vmatpush1.bf16.msra.mxu0 %v732
    %981 = vmatprep.subr.bf16.mxu0 0
    %982 = vmatpush1.bf16.msra.mxu0 0
    %983 = vmatprep.subr.bf16.mxu0 0
    %984 = vmatpush1.bf16.msra.mxu0 0
    %985 = vmatprep.subr.bf16.mxu0 0
    %986 = vmatpush1.bf16.msra.mxu0 0
    %987 = vmatprep.subr.bf16.mxu0 0
    %988 = vmatpush1.bf16.msra.mxu0 0
    %989 = vmatprep.subr.bf16.mxu0 0
    %990 = vmatpush1.bf16.msra.mxu0 0
    %991 = vmatprep.subr.bf16.mxu0 0
    %992 = vmatpush1.bf16.msra.mxu0 0
    %993 = vmatprep.subr.bf16.mxu0 0
    %994 = vmatpush1.bf16.msra.mxu0 0
    %995 = vmatprep.subr.bf16.mxu0 0
    %996 = vmatpush1.bf16.msra.mxu0 0
    %997 = vmatprep.mubr.bf16.mxu0 0
    %998 = vmatmul.mubr.bf16.gmra.mrb[0].mxu0 %v964
    %v999 = vpop.f32.mrb[0].mxu0
    %v1000 = vadd.f32 %v619, %v999
    %v1001 = vpop.f32.mrb[0].mxu0
    %v1002 = vadd.f32 %v623, %v1001
    %v1003 = vpop.f32.mrb[0].mxu0
    %v1004 = vpop.f32.mrb[0].mxu0
    %1005 = vdwg.mxu0
    %1006 = vmatprep.subr.bf16.mxu0 0
    %1007 = vmatpush1.bf16.msra.mxu0 %v713
    %1008 = vmatprep.subr.bf16.mxu0 0
    %1009 = vmatpush1.bf16.msra.mxu0 %v716
    %1010 = vmatprep.subr.bf16.mxu0 0
    %1011 = vmatpush1.bf16.msra.mxu0 %v719
    %1012 = vmatprep.subr.bf16.mxu0 0
    %1013 = vmatpush1.bf16.msra.mxu0 %v722
    %1014 = vmatprep.subr.bf16.mxu0 0
    %1015 = vmatpush1.bf16.msra.mxu0 %v725
    %1016 = vmatprep.subr.bf16.mxu0 0
    %1017 = vmatpush1.bf16.msra.mxu0 %v728
    %1018 = vmatprep.subr.bf16.mxu0 0
    %1019 = vmatpush1.bf16.msra.mxu0 %v731
    %1020 = vmatprep.subr.bf16.mxu0 0
    %1021 = vmatpush1.bf16.msra.mxu0 %v734
    %1022 = vmatprep.subr.bf16.mxu0 0
    %1023 = vmatpush1.bf16.msra.mxu0 0
    %1024 = vmatprep.subr.bf16.mxu0 0
    %1025 = vmatpush1.bf16.msra.mxu0 0
    %1026 = vmatprep.subr.bf16.mxu0 0
    %1027 = vmatpush1.bf16.msra.mxu0 0
    %1028 = vmatprep.subr.bf16.mxu0 0
    %1029 = vmatpush1.bf16.msra.mxu0 0
    %1030 = vmatprep.subr.bf16.mxu0 0
    %1031 = vmatpush1.bf16.msra.mxu0 0
    %1032 = vmatprep.subr.bf16.mxu0 0
    %1033 = vmatpush1.bf16.msra.mxu0 0
    %1034 = vmatprep.subr.bf16.mxu0 0
    %1035 = vmatpush1.bf16.msra.mxu0 0
    %1036 = vmatprep.subr.bf16.mxu0 0
    %1037 = vmatpush1.bf16.msra.mxu0 0
    %1038 = vmatprep.mubr.bf16.mxu0 0
    %1039 = vmatmul.mubr.bf16.gmra.mrb[0].mxu0 %v964
    %v1040 = vpop.f32.mrb[0].mxu0
    %v1041 = vadd.f32 %v627, %v1040
    %v1042 = vpop.f32.mrb[0].mxu0
    %v1043 = vpop.f32.mrb[0].mxu0
    %v1044 = vpop.f32.mrb[0].mxu0
    %1045 = vdwg.mxu0
    %v1046 = vadd.f32 %v489, %v1000
    %v1047 = vxor.u32 %v1046, 2147483648
    %v1048 = vmul.f32 %v1047, 1.442695
    %v1049 = vpow.pop %v1048
    %v1050 = vadd.f32 %v1049, 1.0
    %v1051 = vrcp.pop %v1050
    %v1052 = vmul.f32 1.0, %v1051
    %v1053 = vadd.f32 %v491, %v1002
    %v1054 = vxor.u32 %v1053, 2147483648
    %v1055 = vmul.f32 %v1054, 1.442695
    %v1056 = vpow.pop %v1055
    %v1057 = vadd.f32 %v1056, 1.0
    %v1058 = vrcp.pop %v1057
    %v1059 = vmul.f32 1.0, %v1058
    %v1060 = vmul.f32 %v1052, %v1041
    %v1061 = vadd.f32 %v560, %v1060
    %v1062 = vtanh.pop %v1061
    %v1063 = vsub.f32 1.0, %v1059
    %v1064 = vmul.f32 %v1063, %v1062
    %v1065 = vmul.f32 %v1059, %v963
    %v1066 = vadd.f32 %v1064, %v1065
    %v1067 = vpack.c.bf16 %v1066, %v1066
    %1068 = vmatprep.subr.bf16.mxu0 %v712
    %1069 = vmatpush1.bf16.msra.mxu0 %v711
    %1070 = vmatprep.subr.bf16.mxu0 %v715
    %1071 = vmatpush1.bf16.msra.mxu0 %v714
    %1072 = vmatprep.subr.bf16.mxu0 %v718
    %1073 = vmatpush1.bf16.msra.mxu0 %v717
    %1074 = vmatprep.subr.bf16.mxu0 %v721
    %1075 = vmatpush1.bf16.msra.mxu0 %v720
    %1076 = vmatprep.subr.bf16.mxu0 %v724
    %1077 = vmatpush1.bf16.msra.mxu0 %v723
    %1078 = vmatprep.subr.bf16.mxu0 %v727
    %1079 = vmatpush1.bf16.msra.mxu0 %v726
    %1080 = vmatprep.subr.bf16.mxu0 %v730
    %1081 = vmatpush1.bf16.msra.mxu0 %v729
    %1082 = vmatprep.subr.bf16.mxu0 %v733
    %1083 = vmatpush1.bf16.msra.mxu0 %v732
    %1084 = vmatprep.subr.bf16.mxu0 0
    %1085 = vmatpush1.bf16.msra.mxu0 0
    %1086 = vmatprep.subr.bf16.mxu0 0
    %1087 = vmatpush1.bf16.msra.mxu0 0
    %1088 = vmatprep.subr.bf16.mxu0 0
    %1089 = vmatpush1.bf16.msra.mxu0 0
    %1090 = vmatprep.subr.bf16.mxu0 0
    %1091 = vmatpush1.bf16.msra.mxu0 0
    %1092 = vmatprep.subr.bf16.mxu0 0
    %1093 = vmatpush1.bf16.msra.mxu0 0
    %1094 = vmatprep.subr.bf16.mxu0 0
    %1095 = vmatpush1.bf16.msra.mxu0 0
    %1096 = vmatprep.subr.bf16.mxu0 0
    %1097 = vmatpush1.bf16.msra.mxu0 0
    %1098 = vmatprep.subr.bf16.mxu0 0
    %1099 = vmatpush1.bf16.msra.mxu0 0
    %1100 = vmatprep.mubr.bf16.mxu0 0
    %1101 = vmatmul.mubr.bf16.gmra.mrb[0].mxu0 %v1067
    %v1102 = vpop.f32.mrb[0].mxu0
    %v1103 = vadd.f32 %v619, %v1102
    %v1104 = vpop.f32.mrb[0].mxu0
    %v1105 = vadd.f32 %v623, %v1104
    %v1106 = vpop.f32.mrb[0].mxu0
    %v1107 = vpop.f32.mrb[0].mxu0
    %1108 = vdwg.mxu0
    %1109 = vmatprep.subr.bf16.mxu0 0
    %1110 = vmatpush1.bf16.msra.mxu0 %v713
    %1111 = vmatprep.subr.bf16.mxu0 0
    %1112 = vmatpush1.bf16.msra.mxu0 %v716
    %1113 = vmatprep.subr.bf16.mxu0 0
    %1114 = vmatpush1.bf16.msra.mxu0 %v719
    %1115 = vmatprep.subr.bf16.mxu0 0
    %1116 = vmatpush1.bf16.msra.mxu0 %v722
    %1117 = vmatprep.subr.bf16.mxu0 0
    %1118 = vmatpush1.bf16.msra.mxu0 %v725
    %1119 = vmatprep.subr.bf16.mxu0 0
    %1120 = vmatpush1.bf16.msra.mxu0 %v728
    %1121 = vmatprep.subr.bf16.mxu0 0
    %1122 = vmatpush1.bf16.msra.mxu0 %v731
    %1123 = vmatprep.subr.bf16.mxu0 0
    %1124 = vmatpush1.bf16.msra.mxu0 %v734
    %1125 = vmatprep.subr.bf16.mxu0 0
    %1126 = vmatpush1.bf16.msra.mxu0 0
    %1127 = vmatprep.subr.bf16.mxu0 0
    %1128 = vmatpush1.bf16.msra.mxu0 0
    %1129 = vmatprep.subr.bf16.mxu0 0
    %1130 = vmatpush1.bf16.msra.mxu0 0
    %1131 = vmatprep.subr.bf16.mxu0 0
    %1132 = vmatpush1.bf16.msra.mxu0 0
    %1133 = vmatprep.subr.bf16.mxu0 0
    %1134 = vmatpush1.bf16.msra.mxu0 0
    %1135 = vmatprep.subr.bf16.mxu0 0
    %1136 = vmatpush1.bf16.msra.mxu0 0
    %1137 = vmatprep.subr.bf16.mxu0 0
    %1138 = vmatpush1.bf16.msra.mxu0 0
    %1139 = vmatprep.subr.bf16.mxu0 0
    %1140 = vmatpush1.bf16.msra.mxu0 0
    %1141 = vmatprep.mubr.bf16.mxu0 0
    %1142 = vmatmul.mubr.bf16.gmra.mrb[0].mxu0 %v1067
    %v1143 = vpop.f32.mrb[0].mxu0
    %v1144 = vadd.f32 %v627, %v1143
    %v1145 = vpop.f32.mrb[0].mxu0
    %v1146 = vpop.f32.mrb[0].mxu0
    %v1147 = vpop.f32.mrb[0].mxu0
    %1148 = vdwg.mxu0
    %v1149 = vadd.f32 %v493, %v1103
    %v1150 = vxor.u32 %v1149, 2147483648
    %v1151 = vmul.f32 %v1150, 1.442695
    %v1152 = vpow.pop %v1151
    %v1153 = vadd.f32 %v1152, 1.0
    %v1154 = vrcp.pop %v1153
    %v1155 = vmul.f32 1.0, %v1154
    %v1156 = vadd.f32 %v495, %v1105
    %v1157 = vxor.u32 %v1156, 2147483648
    %v1158 = vmul.f32 %v1157, 1.442695
    %v1159 = vpow.pop %v1158
    %v1160 = vadd.f32 %v1159, 1.0
    %v1161 = vrcp.pop %v1160
    %v1162 = vmul.f32 1.0, %v1161
    %v1163 = vmul.f32 %v1155, %v1144
    %v1164 = vadd.f32 %v563, %v1163
    %v1165 = vtanh.pop %v1164
    %v1166 = vsub.f32 1.0, %v1162
    %v1167 = vmul.f32 %v1166, %v1165
    %v1168 = vmul.f32 %v1162, %v1066
    %v1169 = vadd.f32 %v1167, %v1168
    %v1170 = vpack.c.bf16 %v1169, %v1169
    %1171 = vmatprep.subr.bf16.mxu0 %v712
    %1172 = vmatpush1.bf16.msra.mxu0 %v711
    %1173 = vmatprep.subr.bf16.mxu0 %v715
    %1174 = vmatpush1.bf16.msra.mxu0 %v714
    %1175 = vmatprep.subr.bf16.mxu0 %v718
    %1176 = vmatpush1.bf16.msra.mxu0 %v717
    %1177 = vmatprep.subr.bf16.mxu0 %v721
    %1178 = vmatpush1.bf16.msra.mxu0 %v720
    %1179 = vmatprep.subr.bf16.mxu0 %v724
    %1180 = vmatpush1.bf16.msra.mxu0 %v723
    %1181 = vmatprep.subr.bf16.mxu0 %v727
    %1182 = vmatpush1.bf16.msra.mxu0 %v726
    %1183 = vmatprep.subr.bf16.mxu0 %v730
    %1184 = vmatpush1.bf16.msra.mxu0 %v729
    %1185 = vmatprep.subr.bf16.mxu0 %v733
    %1186 = vmatpush1.bf16.msra.mxu0 %v732
    %1187 = vmatprep.subr.bf16.mxu0 0
    %1188 = vmatpush1.bf16.msra.mxu0 0
    %1189 = vmatprep.subr.bf16.mxu0 0
    %1190 = vmatpush1.bf16.msra.mxu0 0
    %1191 = vmatprep.subr.bf16.mxu0 0
    %1192 = vmatpush1.bf16.msra.mxu0 0
    %1193 = vmatprep.subr.bf16.mxu0 0
    %1194 = vmatpush1.bf16.msra.mxu0 0
    %1195 = vmatprep.subr.bf16.mxu0 0
    %1196 = vmatpush1.bf16.msra.mxu0 0
    %1197 = vmatprep.subr.bf16.mxu0 0
    %1198 = vmatpush1.bf16.msra.mxu0 0
    %1199 = vmatprep.subr.bf16.mxu0 0
    %1200 = vmatpush1.bf16.msra.mxu0 0
    %1201 = vmatprep.subr.bf16.mxu0 0
    %1202 = vmatpush1.bf16.msra.mxu0 0
    %1203 = vmatprep.mubr.bf16.mxu0 0
    %1204 = vmatmul.mubr.bf16.gmra.mrb[0].mxu0 %v1170
    %v1205 = vpop.f32.mrb[0].mxu0
    %v1206 = vadd.f32 %v619, %v1205
    %v1207 = vpop.f32.mrb[0].mxu0
    %v1208 = vadd.f32 %v623, %v1207
    %v1209 = vpop.f32.mrb[0].mxu0
    %v1210 = vpop.f32.mrb[0].mxu0
    %1211 = vdwg.mxu0
    %1212 = vmatprep.subr.bf16.mxu0 0
    %1213 = vmatpush1.bf16.msra.mxu0 %v713
    %1214 = vmatprep.subr.bf16.mxu0 0
    %1215 = vmatpush1.bf16.msra.mxu0 %v716
    %1216 = vmatprep.subr.bf16.mxu0 0
    %1217 = vmatpush1.bf16.msra.mxu0 %v719
    %1218 = vmatprep.subr.bf16.mxu0 0
    %1219 = vmatpush1.bf16.msra.mxu0 %v722
    %1220 = vmatprep.subr.bf16.mxu0 0
    %1221 = vmatpush1.bf16.msra.mxu0 %v725
    %1222 = vmatprep.subr.bf16.mxu0 0
    %1223 = vmatpush1.bf16.msra.mxu0 %v728
    %1224 = vmatprep.subr.bf16.mxu0 0
    %1225 = vmatpush1.bf16.msra.mxu0 %v731
    %1226 = vmatprep.subr.bf16.mxu0 0
    %1227 = vmatpush1.bf16.msra.mxu0 %v734
    %1228 = vmatprep.subr.bf16.mxu0 0
    %1229 = vmatpush1.bf16.msra.mxu0 0
    %1230 = vmatprep.subr.bf16.mxu0 0
    %1231 = vmatpush1.bf16.msra.mxu0 0
    %1232 = vmatprep.subr.bf16.mxu0 0
    %1233 = vmatpush1.bf16.msra.mxu0 0
    %1234 = vmatprep.subr.bf16.mxu0 0
    %1235 = vmatpush1.bf16.msra.mxu0 0
    %1236 = vmatprep.subr.bf16.mxu0 0
    %1237 = vmatpush1.bf16.msra.mxu0 0
    %1238 = vmatprep.subr.bf16.mxu0 0
    %1239 = vmatpush1.bf16.msra.mxu0 0
    %1240 = vmatprep.subr.bf16.mxu0 0
    %1241 = vmatpush1.bf16.msra.mxu0 0
    %1242 = vmatprep.subr.bf16.mxu0 0
    %1243 = vmatpush1.bf16.msra.mxu0 0
    %1244 = vmatprep.mubr.bf16.mxu0 0
    %1245 = vmatmul.mubr.bf16.gmra.mrb[0].mxu0 %v1170
    %v1246 = vpop.f32.mrb[0].mxu0
    %v1247 = vadd.f32 %v627, %v1246
    %v1248 = vpop.f32.mrb[0].mxu0
    %v1249 = vpop.f32.mrb[0].mxu0
    %v1250 = vpop.f32.mrb[0].mxu0
    %1251 = vdwg.mxu0
    %v1252 = vadd.f32 %v499, %v1206
    %v1253 = vxor.u32 %v1252, 2147483648
    %v1254 = vmul.f32 %v1253, 1.442695
    %v1255 = vpow.pop %v1254
    %v1256 = vadd.f32 %v1255, 1.0
    %v1257 = vrcp.pop %v1256
    %v1258 = vmul.f32 1.0, %v1257
    %v1259 = vadd.f32 %v501, %v1208
    %v1260 = vxor.u32 %v1259, 2147483648
    %v1261 = vmul.f32 %v1260, 1.442695
    %v1262 = vpow.pop %v1261
    %v1263 = vadd.f32 %v1262, 1.0
    %v1264 = vrcp.pop %v1263
    %v1265 = vmul.f32 1.0, %v1264
    %v1266 = vmul.f32 %v1258, %v1247
    %v1267 = vadd.f32 %v568, %v1266
    %v1268 = vtanh.pop %v1267
    %v1269 = vsub.f32 1.0, %v1265
    %v1270 = vmul.f32 %v1269, %v1268
    %v1271 = vmul.f32 %v1265, %v1169
    %v1272 = vadd.f32 %v1270, %v1271
    %v1273 = vpack.c.bf16 %v1272, %v1272
    %1274 = vmatprep.subr.bf16.mxu0 %v712
    %1275 = vmatpush1.bf16.msra.mxu0 %v711
    %1276 = vmatprep.subr.bf16.mxu0 %v715
    %1277 = vmatpush1.bf16.msra.mxu0 %v714
    %1278 = vmatprep.subr.bf16.mxu0 %v718
    %1279 = vmatpush1.bf16.msra.mxu0 %v717
    %1280 = vmatprep.subr.bf16.mxu0 %v721
    %1281 = vmatpush1.bf16.msra.mxu0 %v720
    %1282 = vmatprep.subr.bf16.mxu0 %v724
    %1283 = vmatpush1.bf16.msra.mxu0 %v723
    %1284 = vmatprep.subr.bf16.mxu0 %v727
    %1285 = vmatpush1.bf16.msra.mxu0 %v726
    %1286 = vmatprep.subr.bf16.mxu0 %v730
    %1287 = vmatpush1.bf16.msra.mxu0 %v729
    %1288 = vmatprep.subr.bf16.mxu0 %v733
    %1289 = vmatpush1.bf16.msra.mxu0 %v732
    %1290 = vmatprep.subr.bf16.mxu0 0
    %1291 = vmatpush1.bf16.msra.mxu0 0
    %1292 = vmatprep.subr.bf16.mxu0 0
    %1293 = vmatpush1.bf16.msra.mxu0 0
    %1294 = vmatprep.subr.bf16.mxu0 0
    %1295 = vmatpush1.bf16.msra.mxu0 0
    %1296 = vmatprep.subr.bf16.mxu0 0
    %1297 = vmatpush1.bf16.msra.mxu0 0
    %1298 = vmatprep.subr.bf16.mxu0 0
    %1299 = vmatpush1.bf16.msra.mxu0 0
    %1300 = vmatprep.subr.bf16.mxu0 0
    %1301 = vmatpush1.bf16.msra.mxu0 0
    %1302 = vmatprep.subr.bf16.mxu0 0
    %1303 = vmatpush1.bf16.msra.mxu0 0
    %1304 = vmatprep.subr.bf16.mxu0 0
    %1305 = vmatpush1.bf16.msra.mxu0 0
    %1306 = vmatprep.mubr.bf16.mxu0 0
    %1307 = vmatmul.mubr.bf16.gmra.mrb[0].mxu0 %v1273
    %v1308 = vpop.f32.mrb[0].mxu0
    %v1309 = vadd.f32 %v619, %v1308
    %v1310 = vpop.f32.mrb[0].mxu0
    %v1311 = vadd.f32 %v623, %v1310
    %v1312 = vpop.f32.mrb[0].mxu0
    %v1313 = vpop.f32.mrb[0].mxu0
    %1314 = vdwg.mxu0
    %1315 = vmatprep.subr.bf16.mxu0 0
    %1316 = vmatpush1.bf16.msra.mxu0 %v713
    %1317 = vmatprep.subr.bf16.mxu0 0
    %1318 = vmatpush1.bf16.msra.mxu0 %v716
    %1319 = vmatprep.subr.bf16.mxu0 0
    %1320 = vmatpush1.bf16.msra.mxu0 %v719
    %1321 = vmatprep.subr.bf16.mxu0 0
    %1322 = vmatpush1.bf16.msra.mxu0 %v722
    %1323 = vmatprep.subr.bf16.mxu0 0
    %1324 = vmatpush1.bf16.msra.mxu0 %v725
    %1325 = vmatprep.subr.bf16.mxu0 0
    %1326 = vmatpush1.bf16.msra.mxu0 %v728
    %1327 = vmatprep.subr.bf16.mxu0 0
    %1328 = vmatpush1.bf16.msra.mxu0 %v731
    %1329 = vmatprep.subr.bf16.mxu0 0
    %1330 = vmatpush1.bf16.msra.mxu0 %v734
    %1331 = vmatprep.subr.bf16.mxu0 0
    %1332 = vmatpush1.bf16.msra.mxu0 0
    %1333 = vmatprep.subr.bf16.mxu0 0
    %1334 = vmatpush1.bf16.msra.mxu0 0
    %1335 = vmatprep.subr.bf16.mxu0 0
    %1336 = vmatpush1.bf16.msra.mxu0 0
    %1337 = vmatprep.subr.bf16.mxu0 0
    %1338 = vmatpush1.bf16.msra.mxu0 0
    %1339 = vmatprep.subr.bf16.mxu0 0
    %1340 = vmatpush1.bf16.msra.mxu0 0
    %1341 = vmatprep.subr.bf16.mxu0 0
    %1342 = vmatpush1.bf16.msra.mxu0 0
    %1343 = vmatprep.subr.bf16.mxu0 0
    %1344 = vmatpush1.bf16.msra.mxu0 0
    %1345 = vmatprep.subr.bf16.mxu0 0
    %1346 = vmatpush1.bf16.msra.mxu0 0
    %1347 = vmatprep.mubr.bf16.mxu0 0
    %1348 = vmatmul.mubr.bf16.gmra.mrb[0].mxu0 %v1273
    %v1349 = vpop.f32.mrb[0].mxu0
    %v1350 = vadd.f32 %v627, %v1349
    %v1351 = vpop.f32.mrb[0].mxu0
    %v1352 = vpop.f32.mrb[0].mxu0
    %v1353 = vpop.f32.mrb[0].mxu0
    %1354 = vdwg.mxu0
    %v1355 = vadd.f32 %v503, %v1309
    %v1356 = vxor.u32 %v1355, 2147483648
    %v1357 = vmul.f32 %v1356, 1.442695
    %v1358 = vpow.pop %v1357
    %v1359 = vadd.f32 %v1358, 1.0
    %v1360 = vrcp.pop %v1359
    %v1361 = vmul.f32 1.0, %v1360
    %v1362 = vadd.f32 %v505, %v1311
    %v1363 = vxor.u32 %v1362, 2147483648
    %v1364 = vmul.f32 %v1363, 1.442695
    %v1365 = vpow.pop %v1364
    %v1366 = vadd.f32 %v1365, 1.0
    %v1367 = vrcp.pop %v1366
    %v1368 = vmul.f32 1.0, %v1367
    %v1369 = vmul.f32 %v1361, %v1350
    %v1370 = vadd.f32 %v571, %v1369
    %v1371 = vtanh.pop %v1370
    %v1372 = vsub.f32 1.0, %v1368
    %v1373 = vmul.f32 %v1372, %v1371
    %v1374 = vmul.f32 %v1368, %v1272
    %v1375 = vadd.f32 %v1373, %v1374
    %v1376 = vpack.c.bf16 %v1375, %v1375
    %1377 = vmatprep.subr.bf16.mxu0 %v712
    %1378 = vmatpush1.bf16.msra.mxu0 %v711
    %1379 = vmatprep.subr.bf16.mxu0 %v715
    %1380 = vmatpush1.bf16.msra.mxu0 %v714
    %1381 = vmatprep.subr.bf16.mxu0 %v718
    %1382 = vmatpush1.bf16.msra.mxu0 %v717
    %1383 = vmatprep.subr.bf16.mxu0 %v721
    %1384 = vmatpush1.bf16.msra.mxu0 %v720
    %1385 = vmatprep.subr.bf16.mxu0 %v724
    %1386 = vmatpush1.bf16.msra.mxu0 %v723
    %1387 = vmatprep.subr.bf16.mxu0 %v727
    %1388 = vmatpush1.bf16.msra.mxu0 %v726
    %1389 = vmatprep.subr.bf16.mxu0 %v730
    %1390 = vmatpush1.bf16.msra.mxu0 %v729
    %1391 = vmatprep.subr.bf16.mxu0 %v733
    %1392 = vmatpush1.bf16.msra.mxu0 %v732
    %1393 = vmatprep.subr.bf16.mxu0 0
    %1394 = vmatpush1.bf16.msra.mxu0 0
    %1395 = vmatprep.subr.bf16.mxu0 0
    %1396 = vmatpush1.bf16.msra.mxu0 0
    %1397 = vmatprep.subr.bf16.mxu0 0
    %1398 = vmatpush1.bf16.msra.mxu0 0
    %1399 = vmatprep.subr.bf16.mxu0 0
    %1400 = vmatpush1.bf16.msra.mxu0 0
    %1401 = vmatprep.subr.bf16.mxu0 0
    %1402 = vmatpush1.bf16.msra.mxu0 0
    %1403 = vmatprep.subr.bf16.mxu0 0
    %1404 = vmatpush1.bf16.msra.mxu0 0
    %1405 = vmatprep.subr.bf16.mxu0 0
    %1406 = vmatpush1.bf16.msra.mxu0 0
    %1407 = vmatprep.subr.bf16.mxu0 0
    %1408 = vmatpush1.bf16.msra.mxu0 0
    %1409 = vmatprep.mubr.bf16.mxu0 0
    %1410 = vmatmul.mubr.bf16.gmra.mrb[0].mxu0 %v1376
    %v1411 = vpop.f32.mrb[0].mxu0
    %v1412 = vadd.f32 %v619, %v1411
    %v1413 = vpop.f32.mrb[0].mxu0
    %v1414 = vadd.f32 %v623, %v1413
    %v1415 = vpop.f32.mrb[0].mxu0
    %v1416 = vpop.f32.mrb[0].mxu0
    %1417 = vdwg.mxu0
    %1418 = vmatprep.subr.bf16.mxu0 0
    %1419 = vmatpush1.bf16.msra.mxu0 %v713
    %1420 = vmatprep.subr.bf16.mxu0 0
    %1421 = vmatpush1.bf16.msra.mxu0 %v716
    %1422 = vmatprep.subr.bf16.mxu0 0
    %1423 = vmatpush1.bf16.msra.mxu0 %v719
    %1424 = vmatprep.subr.bf16.mxu0 0
    %1425 = vmatpush1.bf16.msra.mxu0 %v722
    %1426 = vmatprep.subr.bf16.mxu0 0
    %1427 = vmatpush1.bf16.msra.mxu0 %v725
    %1428 = vmatprep.subr.bf16.mxu0 0
    %1429 = vmatpush1.bf16.msra.mxu0 %v728
    %1430 = vmatprep.subr.bf16.mxu0 0
    %1431 = vmatpush1.bf16.msra.mxu0 %v731
    %1432 = vmatprep.subr.bf16.mxu0 0
    %1433 = vmatpush1.bf16.msra.mxu0 %v734
    %1434 = vmatprep.subr.bf16.mxu0 0
    %1435 = vmatpush1.bf16.msra.mxu0 0
    %1436 = vmatprep.subr.bf16.mxu0 0
    %1437 = vmatpush1.bf16.msra.mxu0 0
    %1438 = vmatprep.subr.bf16.mxu0 0
    %1439 = vmatpush1.bf16.msra.mxu0 0
    %1440 = vmatprep.subr.bf16.mxu0 0
    %1441 = vmatpush1.bf16.msra.mxu0 0
    %1442 = vmatprep.subr.bf16.mxu0 0
    %1443 = vmatpush1.bf16.msra.mxu0 0
    %1444 = vmatprep.subr.bf16.mxu0 0
    %1445 = vmatpush1.bf16.msra.mxu0 0
    %1446 = vmatprep.subr.bf16.mxu0 0
    %1447 = vmatpush1.bf16.msra.mxu0 0
    %1448 = vmatprep.subr.bf16.mxu0 0
    %1449 = vmatpush1.bf16.msra.mxu0 0
    %1450 = vmatprep.mubr.bf16.mxu0 0
    %1451 = vmatmul.mubr.bf16.gmra.mrb[0].mxu0 %v1376
    %v1452 = vpop.f32.mrb[0].mxu0
    %v1453 = vadd.f32 %v627, %v1452
    %v1454 = vpop.f32.mrb[0].mxu0
    %v1455 = vpop.f32.mrb[0].mxu0
    %v1456 = vpop.f32.mrb[0].mxu0
    %1457 = vdwg.mxu0
    %v1458 = vadd.f32 %v509, %v1412
    %v1459 = vxor.u32 %v1458, 2147483648
    %v1460 = vmul.f32 %v1459, 1.442695
    %v1461 = vpow.pop %v1460
    %v1462 = vadd.f32 %v1461, 1.0
    %v1463 = vrcp.pop %v1462
    %v1464 = vmul.f32 1.0, %v1463
    %v1465 = vadd.f32 %v511, %v1414
    %v1466 = vxor.u32 %v1465, 2147483648
    %v1467 = vmul.f32 %v1466, 1.442695
    %v1468 = vpow.pop %v1467
    %v1469 = vadd.f32 %v1468, 1.0
    %v1470 = vrcp.pop %v1469
    %v1471 = vmul.f32 1.0, %v1470
    %v1472 = vmul.f32 %v1464, %v1453
    %v1473 = vadd.f32 %v576, %v1472
    %v1474 = vtanh.pop %v1473
    %v1475 = vsub.f32 1.0, %v1471
    %v1476 = vmul.f32 %v1475, %v1474
    %v1477 = vmul.f32 %v1471, %v1375
    %v1478 = vadd.f32 %v1476, %v1477
    %v1479 = vpack.c.bf16 %v1478, %v1478
    %1480 = vmatprep.subr.bf16.mxu0 %v712
    %1481 = vmatpush1.bf16.msra.mxu0 %v711
    %1482 = vmatprep.subr.bf16.mxu0 %v715
    %1483 = vmatpush1.bf16.msra.mxu0 %v714
    %1484 = vmatprep.subr.bf16.mxu0 %v718
    %1485 = vmatpush1.bf16.msra.mxu0 %v717
    %1486 = vmatprep.subr.bf16.mxu0 %v721
    %1487 = vmatpush1.bf16.msra.mxu0 %v720
    %1488 = vmatprep.subr.bf16.mxu0 %v724
    %1489 = vmatpush1.bf16.msra.mxu0 %v723
    %1490 = vmatprep.subr.bf16.mxu0 %v727
    %1491 = vmatpush1.bf16.msra.mxu0 %v726
    %1492 = vmatprep.subr.bf16.mxu0 %v730
    %1493 = vmatpush1.bf16.msra.mxu0 %v729
    %1494 = vmatprep.subr.bf16.mxu0 %v733
    %1495 = vmatpush1.bf16.msra.mxu0 %v732
    %1496 = vmatprep.subr.bf16.mxu0 0
    %1497 = vmatpush1.bf16.msra.mxu0 0
    %1498 = vmatprep.subr.bf16.mxu0 0
    %1499 = vmatpush1.bf16.msra.mxu0 0
    %1500 = vmatprep.subr.bf16.mxu0 0
    %1501 = vmatpush1.bf16.msra.mxu0 0
    %1502 = vmatprep.subr.bf16.mxu0 0
    %1503 = vmatpush1.bf16.msra.mxu0 0
    %1504 = vmatprep.subr.bf16.mxu0 0
    %1505 = vmatpush1.bf16.msra.mxu0 0
    %1506 = vmatprep.subr.bf16.mxu0 0
    %1507 = vmatpush1.bf16.msra.mxu0 0
    %1508 = vmatprep.subr.bf16.mxu0 0
    %1509 = vmatpush1.bf16.msra.mxu0 0
    %1510 = vmatprep.subr.bf16.mxu0 0
    %1511 = vmatpush1.bf16.msra.mxu0 0
    %1512 = vmatprep.mubr.bf16.mxu0 0
    %1513 = vmatmul.mubr.bf16.gmra.mrb[0].mxu0 %v1479
    %v1514 = vpop.f32.mrb[0].mxu0
    %v1515 = vadd.f32 %v619, %v1514
    %v1516 = vpop.f32.mrb[0].mxu0
    %v1517 = vadd.f32 %v623, %v1516
    %v1518 = vpop.f32.mrb[0].mxu0
    %v1519 = vpop.f32.mrb[0].mxu0
    %1520 = vdwg.mxu0
    %1521 = vmatprep.subr.bf16.mxu0 0
    %1522 = vmatpush1.bf16.msra.mxu0 %v713
    %1523 = vmatprep.subr.bf16.mxu0 0
    %1524 = vmatpush1.bf16.msra.mxu0 %v716
    %1525 = vmatprep.subr.bf16.mxu0 0
    %1526 = vmatpush1.bf16.msra.mxu0 %v719
    %1527 = vmatprep.subr.bf16.mxu0 0
    %1528 = vmatpush1.bf16.msra.mxu0 %v722
    %1529 = vmatprep.subr.bf16.mxu0 0
    %1530 = vmatpush1.bf16.msra.mxu0 %v725
    %1531 = vmatprep.subr.bf16.mxu0 0
    %1532 = vmatpush1.bf16.msra.mxu0 %v728
    %1533 = vmatprep.subr.bf16.mxu0 0
    %1534 = vmatpush1.bf16.msra.mxu0 %v731
    %1535 = vmatprep.subr.bf16.mxu0 0
    %1536 = vmatpush1.bf16.msra.mxu0 %v734
    %1537 = vmatprep.subr.bf16.mxu0 0
    %1538 = vmatpush1.bf16.msra.mxu0 0
    %1539 = vmatprep.subr.bf16.mxu0 0
    %1540 = vmatpush1.bf16.msra.mxu0 0
    %1541 = vmatprep.subr.bf16.mxu0 0
    %1542 = vmatpush1.bf16.msra.mxu0 0
    %1543 = vmatprep.subr.bf16.mxu0 0
    %1544 = vmatpush1.bf16.msra.mxu0 0
    %1545 = vmatprep.subr.bf16.mxu0 0
    %1546 = vmatpush1.bf16.msra.mxu0 0
    %1547 = vmatprep.subr.bf16.mxu0 0
    %1548 = vmatpush1.bf16.msra.mxu0 0
    %1549 = vmatprep.subr.bf16.mxu0 0
    %1550 = vmatpush1.bf16.msra.mxu0 0
    %1551 = vmatprep.subr.bf16.mxu0 0
    %1552 = vmatpush1.bf16.msra.mxu0 0
    %1553 = vmatprep.mubr.bf16.mxu0 0
    %1554 = vmatmul.mubr.bf16.gmra.mrb[0].mxu0 %v1479
    %v1555 = vpop.f32.mrb[0].mxu0
    %v1556 = vadd.f32 %v627, %v1555
    %v1557 = vpop.f32.mrb[0].mxu0
    %v1558 = vpop.f32.mrb[0].mxu0
    %v1559 = vpop.f32.mrb[0].mxu0
    %1560 = vdwg.mxu0
    %v1561 = vadd.f32 %v513, %v1515
    %v1562 = vxor.u32 %v1561, 2147483648
    %v1563 = vmul.f32 %v1562, 1.442695
    %v1564 = vpow.pop %v1563
    %v1565 = vadd.f32 %v1564, 1.0
    %v1566 = vrcp.pop %v1565
    %v1567 = vmul.f32 1.0, %v1566
    %v1568 = vadd.f32 %v515, %v1517
    %v1569 = vxor.u32 %v1568, 2147483648
    %v1570 = vmul.f32 %v1569, 1.442695
    %v1571 = vpow.pop %v1570
    %v1572 = vadd.f32 %v1571, 1.0
    %v1573 = vrcp.pop %v1572
    %v1574 = vmul.f32 1.0, %v1573
    %v1575 = vmul.f32 %v1567, %v1556
    %v1576 = vadd.f32 %v579, %v1575
    %v1577 = vtanh.pop %v1576
    %v1578 = vsub.f32 1.0, %v1574
    %v1579 = vmul.f32 %v1578, %v1577
    %v1580 = vmul.f32 %v1574, %v1478
    %v1581 = vadd.f32 %v1579, %v1580
    %v1582 = vpack.c.bf16 %v1581, %v1581
    %v1583 = vld [vmem:[#allocation4] sm:$0xf]
    %v1584 = vld [vmem:[#allocation4 + $0x4] sm:$0xf]
    %v1585 = vld [vmem:[#allocation4 + $0x8] sm:$0xf]
    %v1586 = vld [vmem:[#allocation4 + $0xc] sm:$0xf]
    %v1587 = vld [vmem:[#allocation4 + $0x10] sm:$0xf]
    %v1588 = vld [vmem:[#allocation4 + $0x14] sm:$0xf]
    %v1589 = vld [vmem:[#allocation4 + $0x18] sm:$0xf]
    %v1590 = vld [vmem:[#allocation4 + $0x1c] sm:$0xf]
    %v1591 = vld [vmem:[#allocation4 + $0x20] sm:$0xf]
    %v1592 = vld [vmem:[#allocation4 + $0x24] sm:$0xf]
    %v1593 = vld [vmem:[#allocation4 + $0x28] sm:$0xf]
    %v1594 = vld [vmem:[#allocation4 + $0x2c] sm:$0xf]
    %v1595 = vld [vmem:[#allocation4 + $0x30] sm:$0xf]
    %v1596 = vld [vmem:[#allocation4 + $0x34] sm:$0xf]
    %v1597 = vld [vmem:[#allocation4 + $0x38] sm:$0xf]
    %v1598 = vld [vmem:[#allocation4 + $0x3c] sm:$0xf]
    %v1599 = vld [vmem:[%s9] sm:$0x1]
    %v1601 = vlaneseq
    %v1602 = vshrl.u32 %v1601, 7
    %v1603 = vsub.s32 0, %v1602
    %v1604 = vrot.slane %v1599, %v1603
    %v1622 = vunpack.c.l.b16 %v1583
    %v1623 = vunpack.c.l.b16 %v1584
    %v1624 = vunpack.c.l.b16 %v1585
    %v1625 = vunpack.c.l.b16 %v1586
    %v1626 = vunpack.c.l.b16 %v1587
    %v1627 = vunpack.c.l.b16 %v1588
    %v1628 = vunpack.c.l.b16 %v1589
    %v1629 = vunpack.c.l.b16 %v1590
    %v1630 = vunpack.c.l.b16 %v1591
    %v1631 = vunpack.c.l.b16 %v1592
    %v1632 = vunpack.c.l.b16 %v1593
    %v1633 = vunpack.c.l.b16 %v1594
    %v1634 = vunpack.c.l.b16 %v1595
    %v1635 = vunpack.c.l.b16 %v1596
    %v1636 = vunpack.c.l.b16 %v1597
    %v1637 = vunpack.c.l.b16 %v1598
    %v1638 = vpack.c.b16 %v1623, %v1622
    %v1639 = vpack.c.b16 %v1625, %v1624
    %v1640 = vpack.c.b16 %v1627, %v1626
    %v1641 = vpack.c.b16 %v1629, %v1628
    %v1642 = vpack.c.b16 %v1631, %v1630
    %v1643 = vpack.c.b16 %v1633, %v1632
    %v1644 = vpack.c.b16 %v1635, %v1634
    %v1645 = vpack.c.b16 %v1637, %v1636
    %1654 = vmatprep.subr.bf16.mxu0 0
    %1655 = vmatpush1.bf16.msra.mxu0 %v1638
    %1656 = vmatprep.subr.bf16.mxu0 0
    %1657 = vmatpush1.bf16.msra.mxu0 %v1639
    %1658 = vmatprep.subr.bf16.mxu0 0
    %1659 = vmatpush1.bf16.msra.mxu0 %v1640
    %1660 = vmatprep.subr.bf16.mxu0 0
    %1661 = vmatpush1.bf16.msra.mxu0 %v1641
    %1662 = vmatprep.subr.bf16.mxu0 0
    %1663 = vmatpush1.bf16.msra.mxu0 %v1642
    %1664 = vmatprep.subr.bf16.mxu0 0
    %1665 = vmatpush1.bf16.msra.mxu0 %v1643
    %1666 = vmatprep.subr.bf16.mxu0 0
    %1667 = vmatpush1.bf16.msra.mxu0 %v1644
    %1668 = vmatprep.subr.bf16.mxu0 0
    %1669 = vmatpush1.bf16.msra.mxu0 %v1645
    %1670 = vmatprep.subr.bf16.mxu0 0
    %1671 = vmatpush1.bf16.msra.mxu0 0
    %1672 = vmatprep.subr.bf16.mxu0 0
    %1673 = vmatpush1.bf16.msra.mxu0 0
    %1674 = vmatprep.subr.bf16.mxu0 0
    %1675 = vmatpush1.bf16.msra.mxu0 0
    %1676 = vmatprep.subr.bf16.mxu0 0
    %1677 = vmatpush1.bf16.msra.mxu0 0
    %1678 = vmatprep.subr.bf16.mxu0 0
    %1679 = vmatpush1.bf16.msra.mxu0 0
    %1680 = vmatprep.subr.bf16.mxu0 0
    %1681 = vmatpush1.bf16.msra.mxu0 0
    %1682 = vmatprep.subr.bf16.mxu0 0
    %1683 = vmatpush1.bf16.msra.mxu0 0
    %1684 = vmatprep.subr.bf16.mxu0 0
    %1685 = vmatpush1.bf16.msra.mxu0 0
    %1686 = vmatprep.mubr.bf16.mxu0 0
    %1687 = vmatmul.mubr.bf16.gmra.mrb[0].mxu0 %v1582
    %v1688 = vpop.f32.mrb[0].mxu0
    %v1689 = vadd.f32 %v1604, %v1688
    %v1690 = vpop.f32.mrb[0].mxu0
    %v1691 = vpop.f32.mrb[0].mxu0
    %v1692 = vpop.f32.mrb[0].mxu0
    %1693 = vdwg.mxu0
    %1694 = vmax.xlane.f32.xlu0 %v1689
    %v1695 = vpop.xlane.xlu0 %1694
    %v1696 = vsub.f32 %v1689, %v1695
    %v1697 = vmul.f32 %v1696, 1.442695
    %v1698 = vpow.pop %v1697
    %1699 = vadd.xlane.f32.xlu0 %v1698
    %v1700 = vpop.xlane.xlu0 %1699
    %v1701 = vrcp.pop %v1700
    %v1702 = vmul.f32 %v1698, %v1701
    %1703 = vxpose.xlu0.b32.start [1/16] %v1702, 128
    %1704 = vxpose.xlu0.b32.cont [2/16] 0.0, 128
    %1705 = vxpose.xlu0.b32.cont [3/16] 0.0, 128
    %1706 = vxpose.xlu0.b32.cont [4/16] 0.0, 128
    %1707 = vxpose.xlu0.b32.cont [5/16] 0.0, 128
    %1708 = vxpose.xlu0.b32.cont [6/16] 0.0, 128
    %1709 = vxpose.xlu0.b32.cont [7/16] 0.0, 128
    %1710 = vxpose.xlu0.b32.cont [8/16] 0.0, 128
    %1711 = vxpose.xlu0.b32.cont [9/16] 0.0, 128
    %1712 = vxpose.xlu0.b32.cont [10/16] 0.0, 128
    %1713 = vxpose.xlu0.b32.cont [11/16] 0.0, 128
    %1714 = vxpose.xlu0.b32.cont [12/16] 0.0, 128
    %1715 = vxpose.xlu0.b32.cont [13/16] 0.0, 128
    %1716 = vxpose.xlu0.b32.cont [14/16] 0.0, 128
    %1717 = vxpose.xlu0.b32.cont [15/16] 0.0, 128
    %1718 = vxpose.xlu0.b32.end [16/16] 0.0, 128
    %v1719 = vpop.trf.xlu0
    %v1720 = vpop.trf.xlu0
    %v1721 = vpop.trf.xlu0
    %v1722 = vpop.trf.xlu0
    %v1723 = vpop.trf.xlu0
    %v1724 = vpop.trf.xlu0
    %v1725 = vpop.trf.xlu0
    %v1726 = vpop.trf.xlu0
    %v1727 = vpop.trf.xlu0
    %v1728 = vpop.trf.xlu0
    %v1729 = vpop.trf.xlu0
    %v1730 = vpop.trf.xlu0
    %v1731 = vpop.trf.xlu0
    %v1732 = vpop.trf.xlu0
    %v1733 = vpop.trf.xlu0
    %v1734 = vpop.trf.xlu0
    %v1735 = vlaneseq
    %v1736 = vshrl.u32 %v1735, 7
    %v1737 = vsub.s32 0, %v1736
    %v1738 = vrot.slane %v1719, %v1737
    %1740 = vbcast.lane.b32.xlu0 %v1738, 256
    %v1741 = vpop.permute.xlu0 %1740
    %v1742 = vlaneseq
    %v1743 = vshrl.u32 %v1742, 7
    %v1744 = vsub.s32 1, %v1743
    %v1745 = vrot.slane %v1719, %v1744
    %1747 = vbcast.lane.b32.xlu0 %v1745, 256
    %v1748 = vpop.permute.xlu0 %1747
    %v1749 = vlaneseq
    %v1750 = vshrl.u32 %v1749, 7
    %v1751 = vsub.s32 2, %v1750
    %v1752 = vrot.slane %v1719, %v1751
    %1754 = vbcast.lane.b32.xlu0 %v1752, 256
    %v1755 = vpop.permute.xlu0 %1754
    %v1756 = vlaneseq
    %v1757 = vshrl.u32 %v1756, 7
    %v1758 = vsub.s32 3, %v1757
    %v1759 = vrot.slane %v1719, %v1758
    %1761 = vbcast.lane.b32.xlu0 %v1759, 256
    %v1762 = vpop.permute.xlu0 %1761
    %v1763 = vlaneseq
    %v1764 = vshrl.u32 %v1763, 7
    %v1765 = vsub.s32 4, %v1764
    %v1766 = vrot.slane %v1719, %v1765
    %1768 = vbcast.lane.b32.xlu0 %v1766, 256
    %v1769 = vpop.permute.xlu0 %1768
    %v1770 = vlaneseq
    %v1771 = vshrl.u32 %v1770, 7
    %v1772 = vsub.s32 5, %v1771
    %v1773 = vrot.slane %v1719, %v1772
    %1775 = vbcast.lane.b32.xlu0 %v1773, 256
    %v1776 = vpop.permute.xlu0 %1775
    %v1777 = vlaneseq
    %v1778 = vshrl.u32 %v1777, 7
    %v1779 = vsub.s32 6, %v1778
    %v1780 = vrot.slane %v1719, %v1779
    %1782 = vbcast.lane.b32.xlu0 %v1780, 256
    %v1783 = vpop.permute.xlu0 %1782
    %v1784 = vlaneseq
    %v1785 = vshrl.u32 %v1784, 7
    %v1786 = vsub.s32 7, %v1785
    %v1787 = vrot.slane %v1719, %v1786
    %1789 = vbcast.lane.b32.xlu0 %v1787, 256
    %v1790 = vpop.permute.xlu0 %1789
    %v1791 = vmul.f32 %v1741, %v860
    %v1792 = vmul.f32 %v1748, %v963
    %v1793 = vmul.f32 %v1755, %v1066
    %v1794 = vmul.f32 %v1762, %v1169
    %v1795 = vmul.f32 %v1769, %v1272
    %v1796 = vmul.f32 %v1776, %v1375
    %v1797 = vmul.f32 %v1783, %v1478
    %v1798 = vmul.f32 %v1790, %v1581
    %v1799 = vadd.f32 %v1791, %v1792
    %v1800 = vadd.f32 %v1799, %v1793
    %v1801 = vadd.f32 %v1800, %v1794
    %v1802 = vadd.f32 %v1801, %v1795
    %v1803 = vadd.f32 %v1802, %v1796
    %v1804 = vadd.f32 %v1803, %v1797
    %v1805 = vadd.f32 %v1804, %v1798
    %v1806 = vpack.c.bf16 %v1805, %v1805
    %v1807 = vld [vmem:[#allocation6] sm:$0xf]
    %v1808 = vld [vmem:[#allocation6 + $0x4] sm:$0xf]
    %v1809 = vld [vmem:[#allocation6 + $0x8] sm:$0xf]
    %v1810 = vld [vmem:[#allocation6 + $0xc] sm:$0xf]
    %v1811 = vld [vmem:[#allocation6 + $0x10] sm:$0xf]
    %v1812 = vld [vmem:[#allocation6 + $0x14] sm:$0xf]
    %v1813 = vld [vmem:[#allocation6 + $0x18] sm:$0xf]
    %v1814 = vld [vmem:[#allocation6 + $0x1c] sm:$0xf]
    %v1815 = vld [vmem:[#allocation6 + $0x20] sm:$0xf]
    %v1816 = vld [vmem:[#allocation6 + $0x24] sm:$0xf]
    %v1817 = vld [vmem:[#allocation6 + $0x28] sm:$0xf]
    %v1818 = vld [vmem:[#allocation6 + $0x2c] sm:$0xf]
    %v1819 = vld [vmem:[#allocation6 + $0x30] sm:$0xf]
    %v1820 = vld [vmem:[#allocation6 + $0x34] sm:$0xf]
    %v1821 = vld [vmem:[#allocation6 + $0x38] sm:$0xf]
    %v1822 = vld [vmem:[#allocation6 + $0x3c] sm:$0xf]
    %v1823 = vld [vmem:[%s11] sm:$0x1]
    %v1825 = vlaneseq
    %v1826 = vshrl.u32 %v1825, 7
    %v1827 = vsub.s32 0, %v1826
    %v1828 = vrot.slane %v1823, %v1827
    %v1846 = vunpack.c.l.b16 %v1807
    %v1847 = vunpack.c.l.b16 %v1808
    %v1848 = vunpack.c.l.b16 %v1809
    %v1849 = vunpack.c.l.b16 %v1810
    %v1850 = vunpack.c.l.b16 %v1811
    %v1851 = vunpack.c.l.b16 %v1812
    %v1852 = vunpack.c.l.b16 %v1813
    %v1853 = vunpack.c.l.b16 %v1814
    %v1854 = vunpack.c.l.b16 %v1815
    %v1855 = vunpack.c.l.b16 %v1816
    %v1856 = vunpack.c.l.b16 %v1817
    %v1857 = vunpack.c.l.b16 %v1818
    %v1858 = vunpack.c.l.b16 %v1819
    %v1859 = vunpack.c.l.b16 %v1820
    %v1860 = vunpack.c.l.b16 %v1821
    %v1861 = vunpack.c.l.b16 %v1822
    %v1862 = vpack.c.b16 %v1847, %v1846
    %v1863 = vpack.c.b16 %v1849, %v1848
    %v1864 = vpack.c.b16 %v1851, %v1850
    %v1865 = vpack.c.b16 %v1853, %v1852
    %v1866 = vpack.c.b16 %v1855, %v1854
    %v1867 = vpack.c.b16 %v1857, %v1856
    %v1868 = vpack.c.b16 %v1859, %v1858
    %v1869 = vpack.c.b16 %v1861, %v1860
    %1878 = vmatprep.subr.bf16.mxu0 0
    %1879 = vmatpush1.bf16.msra.mxu0 %v1862
    %1880 = vmatprep.subr.bf16.mxu0 0
    %1881 = vmatpush1.bf16.msra.mxu0 %v1863
    %1882 = vmatprep.subr.bf16.mxu0 0
    %1883 = vmatpush1.bf16.msra.mxu0 %v1864
    %1884 = vmatprep.subr.bf16.mxu0 0
    %1885 = vmatpush1.bf16.msra.mxu0 %v1865
    %1886 = vmatprep.subr.bf16.mxu0 0
    %1887 = vmatpush1.bf16.msra.mxu0 %v1866
    %1888 = vmatprep.subr.bf16.mxu0 0
    %1889 = vmatpush1.bf16.msra.mxu0 %v1867
    %1890 = vmatprep.subr.bf16.mxu0 0
    %1891 = vmatpush1.bf16.msra.mxu0 %v1868
    %1892 = vmatprep.subr.bf16.mxu0 0
    %1893 = vmatpush1.bf16.msra.mxu0 %v1869
    %1894 = vmatprep.subr.bf16.mxu0 0
    %1895 = vmatpush1.bf16.msra.mxu0 0
    %1896 = vmatprep.subr.bf16.mxu0 0
    %1897 = vmatpush1.bf16.msra.mxu0 0
    %1898 = vmatprep.subr.bf16.mxu0 0
    %1899 = vmatpush1.bf16.msra.mxu0 0
    %1900 = vmatprep.subr.bf16.mxu0 0
    %1901 = vmatpush1.bf16.msra.mxu0 0
    %1902 = vmatprep.subr.bf16.mxu0 0
    %1903 = vmatpush1.bf16.msra.mxu0 0
    %1904 = vmatprep.subr.bf16.mxu0 0
    %1905 = vmatpush1.bf16.msra.mxu0 0
    %1906 = vmatprep.subr.bf16.mxu0 0
    %1907 = vmatpush1.bf16.msra.mxu0 0
    %1908 = vmatprep.subr.bf16.mxu0 0
    %1909 = vmatpush1.bf16.msra.mxu0 0
    %1910 = vmatprep.mubr.bf16.mxu0 0
    %1911 = vmatmul.mubr.bf16.gmra.mrb[0].mxu0 %v1806
    %v1912 = vpop.f32.mrb[0].mxu0
    %v1913 = vadd.f32 %v1828, %v1912
    %v1914 = vpop.f32.mrb[0].mxu0
    %v1915 = vpop.f32.mrb[0].mxu0
    %v1916 = vpop.f32.mrb[0].mxu0
    %1917 = vdwg.mxu0
    %1918 = vmax.xlane.f32.xlu0 %v1913
    %v1919 = vpop.xlane.xlu0 %1918
    %v1920 = vsub.f32 %v1913, %v1919
    %v1921 = vmul.f32 %v1920, 1.442695
    %v1922 = vpow.pop %v1921
    %1923 = vadd.xlane.f32.xlu0 %v1922
    %v1924 = vpop.xlane.xlu0 %1923
    %v1925 = vlog2.pop %v1924
    %v1926 = vmul.f32 %v1925, 0.6931472
    %v1927 = vsub.f32 %v1920, %v1926
    %1928 = vst [vmem:[%s12] sm:$0xff] %v1927
    // Predicated region
    $region62: #{rnnatt_forward.1} parent=1 // pred_check
      _
    $region63: #{rnnatt_forward.1} parent=1 // pred_check_branch
      %1930 = sbr.rel (0) target = $region65
    $region64: #{rnnatt_forward.1} parent=1 // pred_region
      _
    $region65: #{rnnatt_forward.1} parent=1 // pred_fallthru
      _
    // Predicated region
    $region66: #{rnnatt_forward.1} parent=1 // pred_check
      _
    $region67: #{rnnatt_forward.1} parent=1 // pred_check_branch
      %1932 = sbr.rel (0) target = $region69
    $region68: #{rnnatt_forward.1} parent=1 // pred_region
      _
    $region69: #{rnnatt_forward.1} parent=1 // pred_fallthru
      _
    %1933 = vsyncpa [#allocation3], 1
    %1934 = vsyncpa [#allocation5], 1

</llo_original>
